<compile_context>
chip_gen: v5e
topology: v5e:2x2
jax: 0.10.0
libtpu: 0.0.40
codegen_flags: <defaults>
</compile_context>

<pallas_src>
import functools

import jax
import jax.numpy as jnp
from jax import lax
from jax.experimental import pallas as pl
from jax.experimental.pallas import tpu as pltpu


# ----------------------------- Pallas kernel ------------------------------- #
def _mlp_kernel(x_ref, lat_ref, cr_ref, cc_ref, wh_ref, o_ref, *,
                in_dim, latent_size, out_dim, num_hidden, num_tasks,
                x_is_shared):
    """Fused multi-task MLP for one batch tile.

    x_ref  : (Tx, TB, in_dim)   collocation points (Tx == 1 if shared)
    lat_ref: (T, latent_size)   per-task latent vectors
    cr_ref : (latent+in_dim+1+out_dim, H) row-pack: [W0_lat^T; W0_x^T; b0; Wo]
    cc_ref : (H, L+1)           col-pack: [bh^T | bo (zero padded)]
    wh_ref : (L, H, H)          hidden->hidden weights (PyTorch (out,in) layout)
    o_ref  : (T, out_dim, TB)   output, batch on the lane axis (lane-dense)
    """
    L, T = num_hidden, num_tasks
    nt = (((1,), (1,)), ((), ()))            # contract last axes: A @ B.T

    # ---- load + carve the packed constants once (static slices) ----
    cr = cr_ref[...]
    ofs = 0
    w0lat = cr[ofs:ofs + latent_size, :]; ofs += latent_size     # (lat, H)
    w0t = cr[ofs:ofs + in_dim, :]; ofs += in_dim                 # (in_dim, H)
    b0 = cr[ofs:ofs + 1, :]; ofs += 1                            # (1, H)
    wo = cr[ofs:ofs + out_dim, :]                                # (out_dim, H)
    cc = cc_ref[...]                                             # (H, L+1)
    bo = cc[0:out_dim, L:L + 1]                                  # (out_dim, 1)
    wh = wh_ref[...]                                             # (L, H, H)
    lat = lat_ref[...]                                           # (T, lat)

    # Latent fold for ALL tasks in one tiny matmul:
    #   b0_all[t] = b0 + z_t @ W0_lat^T                          # (T, H)
    b0_all = b0 + jnp.dot(lat, w0lat, preferred_element_type=jnp.float32)

    for t in range(T):                      # static, unrolled (T is small)
        xb = x_ref[0 if x_is_shared else t]                      # (TB, in_dim)

        # Layer 0 on the VPU (in_dim is tiny; avoid MXU fill/drain latency).
        pre = xb[:, 0:1] * w0t[0:1, :]
        for j in range(1, in_dim):
            pre = pre + xb[:, j:j + 1] * w0t[j:j + 1, :]
        h_bm = jnp.tanh(pre + b0_all[t:t + 1, :])                # (TB, H)

        # First hidden layer: NT matmul re-orients to lane-dense (H, TB).
        h = jnp.tanh(
            lax.dot_general(wh[0], h_bm, nt,
                            preferred_element_type=jnp.float32)
            + cc[:, 0:1])                                        # (H, TB)
        for l in range(1, L):
            h = jnp.tanh(
                jnp.dot(wh[l], h, preferred_element_type=jnp.float32)
                + cc[:, l:l + 1])

        # Output layer (no activation), lane-dense store.
        out = jnp.dot(wo, h, preferred_element_type=jnp.float32) + bo
        o_ref[t] = out.astype(o_ref.dtype)                       # (out_dim, TB)


# ------------------------------ Wrapper ------------------------------------ #
def _pick_tile(n):
    """Full-batch tile for small N; lane-aligned tiles capped at 1024 else."""
    if n <= 1024:
        return n
    for t in (1024, 512, 256, 128):
        if n % t == 0:
            return t
    return n


def pack_params(params, *, in_dim):
    """One-time packing of the network constants into two DMA-friendly buffers.

    Under jit in a training loop these concats fuse into a single tiny op; here
    we call it once, outside the per-call hot path.
    """
    w0, b0 = params["w0"], params["b0"]          # (H, in_dim+latent), (H,)
    wh, bh = params["wh"], params["bh"]          # (L, H, H), (L, H)
    wo, bo = params["wo"], params["bo"]          # (out_dim, H), (out_dim,)
    H = w0.shape[0]
    out_dim = wo.shape[0]
    f32 = jnp.float32

    cr = jnp.concatenate([
        w0[:, in_dim:].T,        # (latent_size, H)  W0_lat^T
        w0[:, :in_dim].T,        # (in_dim, H)       W0_x^T
        b0[None, :],             # (1, H)
        wo,                      # (out_dim, H)
    ], axis=0).astype(f32)

    bo_col = jnp.zeros((H, 1), f32).at[:out_dim, 0].set(bo.astype(f32))
    cc = jnp.concatenate([bh.T.astype(f32), bo_col], axis=1)     # (H, L+1)

    return {"cr": cr, "cc": cc, "wh": wh.astype(f32)}


def mad_pinn_forward(x, latent_vector, packed, *, tile_b=None):
    """Forward pass of the mad-pinn Base module.

    x             : (N, in_dim)  or (T, N, in_dim)   collocation points
    latent_vector : (latent_size,) or (T, latent_size)
    packed        : output of pack_params

    Returns (N, out_dim) for a single latent vector, (T, N, out_dim) otherwise.
    """
    cr, cc, wh = packed["cr"], packed["cc"], packed["wh"]

    single_task = (latent_vector.ndim == 1)
    lat = latent_vector[None, :] if single_task else latent_vector
    T, latent_size = lat.shape

    if x.ndim == 2:
        x3 = x[None]                 # shared collocation points across tasks
    else:
        x3 = x
    Tx, N, in_dim = x3.shape
    assert Tx in (1, T)
    x_is_shared = (Tx == 1)

    H = cc.shape[0]
    L = wh.shape[0]
    out_dim = cr.shape[0] - latent_size - in_dim - 1
    assert 1 <= out_dim <= H
    assert L >= 1, "Pallas path requires num_layers >= 3"
    # TODO(synk): support num_layers < 3 (degenerate nets) if ever needed.

    if tile_b is None:
        tile_b = _pick_tile(N)
    assert N % tile_b == 0
    assert tile_b == N or tile_b % 128 == 0
    num_tiles = N // tile_b

    kernel = functools.partial(
        _mlp_kernel, in_dim=in_dim, latent_size=latent_size, out_dim=out_dim,
        num_hidden=L, num_tasks=T, x_is_shared=x_is_shared)

    out = pl.pallas_call(
        kernel,
        out_shape=jax.ShapeDtypeStruct((T, out_dim, N), jnp.float32),
        grid_spec=pltpu.PrefetchScalarGridSpec(
            num_scalar_prefetch=0,
            grid=(num_tiles,),
            in_specs=[
                pl.BlockSpec((Tx, tile_b, in_dim), lambda i: (0, i, 0)),  # x
                pl.BlockSpec((T, latent_size), lambda i: (0, 0)),         # latents
                pl.BlockSpec(cr.shape, lambda i: (0, 0)),                 # row pack
                pl.BlockSpec(cc.shape, lambda i: (0, 0)),                 # col pack
                pl.BlockSpec(wh.shape, lambda i: (0, 0, 0)),              # wh
            ],
            out_specs=pl.BlockSpec((T, out_dim, tile_b), lambda i: (0, 0, i)),
        ),
        compiler_params=pltpu.CompilerParams(
            dimension_semantics=("parallel",)),
    )(x3.astype(jnp.float32), lat.astype(jnp.float32), cr, cc, wh)

    # (T, out_dim, N) -> (T, N, out_dim); for out_dim == 1 this is a pure
    # reshape, which XLA folds (no data movement).
    out = jnp.swapaxes(out, 1, 2)
    return out[0] if single_task else out


# --------------------------- Parameter init --------------------------------- #
def init_params(key, in_dim, latent_size, hidden_dim, out_dim, num_layers):
    """Deterministic parameter init; weights in PyTorch (out, in) layout."""
    d_in = in_dim + latent_size
    L = num_layers - 2
    ks = jax.random.split(key, 2 * (L + 2))

    def lin(kw, kb, fan_in, fan_out):
        bound = 1.0 / jnp.sqrt(jnp.float32(fan_in))
        w = jax.random.uniform(kw, (fan_out, fan_in), jnp.float32, -bound, bound)
        b = jax.random.uniform(kb, (fan_out,), jnp.float32, -bound, bound)
        return w, b

    w0, b0 = lin(ks[0], ks[1], d_in, hidden_dim)
    wh_list, bh_list = [], []
    for l in range(L):
        w, b = lin(ks[2 + 2 * l], ks[3 + 2 * l], hidden_dim, hidden_dim)
        wh_list.append(w)
        bh_list.append(b)
    wo, bo = lin(ks[2 + 2 * L], ks[3 + 2 * L], hidden_dim, out_dim)

    return {
        "w0": w0, "b0": b0,
        "wh": jnp.stack(wh_list, axis=0), "bh": jnp.stack(bh_list, axis=0),
        "wo": wo, "bo": bo,
    }


# -------------------------------- Main -------------------------------------- #
if __name__ == "__main__":
    in_dim, out_dim = 2, 1
    num_layers = 4
    hidden_dim = 32
    latent_size = 16
    n_way = 4
    N = 256

    key = jax.random.PRNGKey(0)
    k_x, k_lat, k_p = jax.random.split(key, 3)

    # Per-task collocation points + per-task latent vectors (amortized launch).
    x_all = jax.random.normal(k_x, (n_way, N, in_dim), jnp.float32)
    latent_all = jax.random.normal(k_lat, (n_way, latent_size), jnp.float32) / jnp.sqrt(
        jnp.float32(latent_size))

    params = init_params(k_p, in_dim, latent_size, hidden_dim, out_dim, num_layers)
    packed = pack_params(params, in_dim=in_dim)

    fwd = jax.jit(mad_pinn_forward)

    # Multi-task path: all n_way tasks in a single pallas_call.
    out_all = jax.block_until_ready(fwd(x_all, latent_all, packed))
    assert out_all.shape == (n_way, N, out_dim)

    # Single-task path (matches the PyTorch forward(x, latent_vector) signature).
    out_single = jax.block_until_ready(fwd(x_all[0], latent_all[0], packed))
    assert out_single.shape == (N, out_dim)

    # Pure-JAX reference of the PyTorch semantics (concat + dense layers).
    def ref_forward(xb, z):
        latb = jnp.broadcast_to(z[None, :], (xb.shape[0], latent_size))
        h = jnp.concatenate([xb, latb], axis=1)
        h = jnp.tanh(h @ params["w0"].T + params["b0"][None, :])
        for l in range(num_layers - 2):
            h = jnp.tanh(h @ params["wh"][l].T + params["bh"][l][None, :])
        return h @ params["wo"].T + params["bo"][None, :]

    ref_all = jnp.stack([ref_forward(x_all[t], latent_all[t]) for t in range(n_way)])

    # Tolerance absorbs MXU default-precision (bf16-pass) differences between
    # the kernel's split first layer (exact f32 on the VPU) and the reference's
    # single concatenated matmul; structural errors would be >> 1e-2.
    assert jnp.allclose(out_all, ref_all, atol=5e-3, rtol=5e-3)
    assert jnp.allclose(out_single, ref_all[0], atol=5e-3, rtol=5e-3)

    print("KERNEL_OK")
</pallas_src>

<mosaic_0001>
module attributes {stable_mosaic.version = 11 : i64} {
  func.func @_mlp_kernel(%arg0: i32, %arg1: memref<4x256x2xf32, #tpu.memory_space<vmem>>, %arg2: memref<4x16xf32, #tpu.memory_space<vmem>>, %arg3: memref<20x32xf32, #tpu.memory_space<vmem>>, %arg4: memref<32x3xf32, #tpu.memory_space<vmem>>, %arg5: memref<2x32x32xf32, #tpu.memory_space<vmem>>, %arg6: memref<4x1x256xf32, #tpu.memory_space<vmem>>) attributes {dimension_semantics = [#tpu.dimension_semantics<parallel>], iteration_bounds = array<i64: 1>, scalar_prefetch = 0 : i64, scratch_operands = 0 : i64, tpu.core_type = #tpu.core_type<tc>, window_params = [{transform_indices = @transform_0, window_bounds = array<i64: 4, 256, 2>}, {pipeline_mode = #tpu.pipeline_mode<synchronous>, transform_indices = @transform_1, window_bounds = array<i64: 4, 16>}, {pipeline_mode = #tpu.pipeline_mode<synchronous>, transform_indices = @transform_2, window_bounds = array<i64: 20, 32>}, {pipeline_mode = #tpu.pipeline_mode<synchronous>, transform_indices = @transform_3, window_bounds = array<i64: 32, 3>}, {pipeline_mode = #tpu.pipeline_mode<synchronous>, transform_indices = @transform_4, window_bounds = array<i64: 2, 32, 32>}, {transform_indices = @transform_5, window_bounds = array<i64: 4, 1, 256>}]} {
    %c0 = arith.constant 0 : index
    %c0_0 = arith.constant 0 : index
    %0 = vector.load %arg3[%c0, %c0_0] : memref<20x32xf32, #tpu.memory_space<vmem>>, vector<20x32xf32>
    %1 = vector.extract_strided_slice %0 {offsets = [0, 0], sizes = [16, 32], strides = [1, 1]} : vector<20x32xf32> to vector<16x32xf32>
    %2 = vector.extract_strided_slice %0 {offsets = [16, 0], sizes = [2, 32], strides = [1, 1]} : vector<20x32xf32> to vector<2x32xf32>
    %3 = vector.extract_strided_slice %0 {offsets = [18, 0], sizes = [1, 32], strides = [1, 1]} : vector<20x32xf32> to vector<1x32xf32>
    %4 = vector.extract_strided_slice %0 {offsets = [19, 0], sizes = [1, 32], strides = [1, 1]} : vector<20x32xf32> to vector<1x32xf32>
    %c0_1 = arith.constant 0 : index
    %c0_2 = arith.constant 0 : index
    %5 = vector.load %arg4[%c0_1, %c0_2] : memref<32x3xf32, #tpu.memory_space<vmem>>, vector<32x3xf32>
    %6 = vector.extract_strided_slice %5 {offsets = [0, 2], sizes = [1, 1], strides = [1, 1]} : vector<32x3xf32> to vector<1x1xf32>
    %c0_3 = arith.constant 0 : index
    %c0_4 = arith.constant 0 : index
    %c0_5 = arith.constant 0 : index
    %7 = vector.load %arg5[%c0_3, %c0_4, %c0_5] : memref<2x32x32xf32, #tpu.memory_space<vmem>>, vector<2x32x32xf32>
    %c0_6 = arith.constant 0 : index
    %c0_7 = arith.constant 0 : index
    %8 = vector.load %arg2[%c0_6, %c0_7] : memref<4x16xf32, #tpu.memory_space<vmem>>, vector<4x16xf32>
    %cst = arith.constant dense<0.000000e+00> : vector<4x32xf32>
    %9 = tpu.matmul %8, %1, %cst {dimension_numbers = #tpu.dot_dimension_numbers<[1], [0], [0], [1], [0, 0, 1, 1], [], []>} : vector<4x16xf32>, vector<16x32xf32>, vector<4x32xf32> -> vector<4x32xf32>
    %10 = vector.broadcast %3 : vector<1x32xf32> to vector<4x32xf32>
    %11 = arith.addf %10, %9 : vector<4x32xf32>
    %c0_8 = arith.constant 0 : index
    %c0_9 = arith.constant 0 : index
    %c0_10 = arith.constant 0 : index
    %12 = vector.load %arg1[%c0_8, %c0_9, %c0_10] : memref<4x256x2xf32, #tpu.memory_space<vmem>>, vector<1x256x2xf32>
    %13 = vector.shape_cast %12 : vector<1x256x2xf32> to vector<256x2xf32>
    %14 = vector.extract_strided_slice %13 {offsets = [0, 0], sizes = [256, 1], strides = [1, 1]} : vector<256x2xf32> to vector<256x1xf32>
    %15 = vector.extract_strided_slice %2 {offsets = [0, 0], sizes = [1, 32], strides = [1, 1]} : vector<2x32xf32> to vector<1x32xf32>
    %16 = vector.broadcast %14 : vector<256x1xf32> to vector<256x32xf32>
    %17 = vector.broadcast %15 : vector<1x32xf32> to vector<256x32xf32>
    %18 = arith.mulf %16, %17 : vector<256x32xf32>
    %19 = vector.extract_strided_slice %13 {offsets = [0, 1], sizes = [256, 1], strides = [1, 1]} : vector<256x2xf32> to vector<256x1xf32>
    %20 = vector.extract_strided_slice %2 {offsets = [1, 0], sizes = [1, 32], strides = [1, 1]} : vector<2x32xf32> to vector<1x32xf32>
    %21 = vector.broadcast %19 : vector<256x1xf32> to vector<256x32xf32>
    %22 = vector.broadcast %20 : vector<1x32xf32> to vector<256x32xf32>
    %23 = arith.mulf %21, %22 : vector<256x32xf32>
    %24 = arith.addf %18, %23 : vector<256x32xf32>
    %25 = vector.extract_strided_slice %11 {offsets = [0, 0], sizes = [1, 32], strides = [1, 1]} : vector<4x32xf32> to vector<1x32xf32>
    %26 = vector.broadcast %25 : vector<1x32xf32> to vector<256x32xf32>
    %27 = arith.addf %24, %26 : vector<256x32xf32>
    %28 = math.tanh %27 : vector<256x32xf32>
    %29 = vector.extract_strided_slice %7 {offsets = [0, 0, 0], sizes = [1, 32, 32], strides = [1, 1, 1]} : vector<2x32x32xf32> to vector<1x32x32xf32>
    %30 = vector.shape_cast %29 : vector<1x32x32xf32> to vector<32x32xf32>
    %cst_11 = arith.constant dense<0.000000e+00> : vector<32x256xf32>
    %31 = tpu.matmul %30, %28, %cst_11 {dimension_numbers = #tpu.dot_dimension_numbers<[1], [1], [0], [0], [0, 0, 1, 0], [], []>} : vector<32x32xf32>, vector<256x32xf32>, vector<32x256xf32> -> vector<32x256xf32>
    %32 = vector.extract_strided_slice %5 {offsets = [0, 0], sizes = [32, 1], strides = [1, 1]} : vector<32x3xf32> to vector<32x1xf32>
    %33 = vector.broadcast %32 : vector<32x1xf32> to vector<32x256xf32>
    %34 = arith.addf %31, %33 : vector<32x256xf32>
    %35 = math.tanh %34 : vector<32x256xf32>
    %36 = vector.extract_strided_slice %7 {offsets = [1, 0, 0], sizes = [1, 32, 32], strides = [1, 1, 1]} : vector<2x32x32xf32> to vector<1x32x32xf32>
    %37 = vector.shape_cast %36 : vector<1x32x32xf32> to vector<32x32xf32>
    %cst_12 = arith.constant dense<0.000000e+00> : vector<32x256xf32>
    %38 = tpu.matmul %37, %35, %cst_12 {dimension_numbers = #tpu.dot_dimension_numbers<[1], [0], [0], [1], [0, 0, 1, 1], [], []>} : vector<32x32xf32>, vector<32x256xf32>, vector<32x256xf32> -> vector<32x256xf32>
    %39 = vector.extract_strided_slice %5 {offsets = [0, 1], sizes = [32, 1], strides = [1, 1]} : vector<32x3xf32> to vector<32x1xf32>
    %40 = vector.broadcast %39 : vector<32x1xf32> to vector<32x256xf32>
    %41 = arith.addf %38, %40 : vector<32x256xf32>
    %42 = math.tanh %41 : vector<32x256xf32>
    %cst_13 = arith.constant dense<0.000000e+00> : vector<1x256xf32>
    %43 = tpu.matmul %4, %42, %cst_13 {dimension_numbers = #tpu.dot_dimension_numbers<[1], [0], [0], [1], [0, 0, 1, 1], [], []>} : vector<1x32xf32>, vector<32x256xf32>, vector<1x256xf32> -> vector<1x256xf32>
    %44 = vector.broadcast %6 : vector<1x1xf32> to vector<1x256xf32>
    %45 = arith.addf %43, %44 : vector<1x256xf32>
    %c0_14 = arith.constant 0 : index
    %c0_15 = arith.constant 0 : index
    %c0_16 = arith.constant 0 : index
    %46 = vector.load %arg6[%c0_14, %c0_15, %c0_16] : memref<4x1x256xf32, #tpu.memory_space<vmem>>, vector<1x1x256xf32>
    %47 = vector.shape_cast %46 : vector<1x1x256xf32> to vector<1x256xf32>
    %48 = vector.shape_cast %45 : vector<1x256xf32> to vector<1x1x256xf32>
    tpu.vector_store %arg6[%c0_14, %c0_15, %c0_16], %48 {strides = array<i32>} : memref<4x1x256xf32, #tpu.memory_space<vmem>>, vector<1x1x256xf32>,
    %c1 = arith.constant 1 : index
    %c0_17 = arith.constant 0 : index
    %c0_18 = arith.constant 0 : index
    %49 = vector.load %arg1[%c1, %c0_17, %c0_18] : memref<4x256x2xf32, #tpu.memory_space<vmem>>, vector<1x256x2xf32>
    %50 = vector.shape_cast %49 : vector<1x256x2xf32> to vector<256x2xf32>
    %51 = vector.extract_strided_slice %50 {offsets = [0, 0], sizes = [256, 1], strides = [1, 1]} : vector<256x2xf32> to vector<256x1xf32>
    %52 = vector.extract_strided_slice %2 {offsets = [0, 0], sizes = [1, 32], strides = [1, 1]} : vector<2x32xf32> to vector<1x32xf32>
    %53 = vector.broadcast %51 : vector<256x1xf32> to vector<256x32xf32>
    %54 = vector.broadcast %52 : vector<1x32xf32> to vector<256x32xf32>
    %55 = arith.mulf %53, %54 : vector<256x32xf32>
    %56 = vector.extract_strided_slice %50 {offsets = [0, 1], sizes = [256, 1], strides = [1, 1]} : vector<256x2xf32> to vector<256x1xf32>
    %57 = vector.extract_strided_slice %2 {offsets = [1, 0], sizes = [1, 32], strides = [1, 1]} : vector<2x32xf32> to vector<1x32xf32>
    %58 = vector.broadcast %56 : vector<256x1xf32> to vector<256x32xf32>
    %59 = vector.broadcast %57 : vector<1x32xf32> to vector<256x32xf32>
    %60 = arith.mulf %58, %59 : vector<256x32xf32>
    %61 = arith.addf %55, %60 : vector<256x32xf32>
    %62 = vector.extract_strided_slice %11 {offsets = [1, 0], sizes = [1, 32], strides = [1, 1]} : vector<4x32xf32> to vector<1x32xf32>
    %63 = vector.broadcast %62 : vector<1x32xf32> to vector<256x32xf32>
    %64 = arith.addf %61, %63 : vector<256x32xf32>
    %65 = math.tanh %64 : vector<256x32xf32>
    %66 = vector.extract_strided_slice %7 {offsets = [0, 0, 0], sizes = [1, 32, 32], strides = [1, 1, 1]} : vector<2x32x32xf32> to vector<1x32x32xf32>
    %67 = vector.shape_cast %66 : vector<1x32x32xf32> to vector<32x32xf32>
    %cst_19 = arith.constant dense<0.000000e+00> : vector<32x256xf32>
    %68 = tpu.matmul %67, %65, %cst_19 {dimension_numbers = #tpu.dot_dimension_numbers<[1], [1], [0], [0], [0, 0, 1, 0], [], []>} : vector<32x32xf32>, vector<256x32xf32>, vector<32x256xf32> -> vector<32x256xf32>
    %69 = vector.extract_strided_slice %5 {offsets = [0, 0], sizes = [32, 1], strides = [1, 1]} : vector<32x3xf32> to vector<32x1xf32>
    %70 = vector.broadcast %69 : vector<32x1xf32> to vector<32x256xf32>
    %71 = arith.addf %68, %70 : vector<32x256xf32>
    %72 = math.tanh %71 : vector<32x256xf32>
    %73 = vector.extract_strided_slice %7 {offsets = [1, 0, 0], sizes = [1, 32, 32], strides = [1, 1, 1]} : vector<2x32x32xf32> to vector<1x32x32xf32>
    %74 = vector.shape_cast %73 : vector<1x32x32xf32> to vector<32x32xf32>
    %cst_20 = arith.constant dense<0.000000e+00> : vector<32x256xf32>
    %75 = tpu.matmul %74, %72, %cst_20 {dimension_numbers = #tpu.dot_dimension_numbers<[1], [0], [0], [1], [0, 0, 1, 1], [], []>} : vector<32x32xf32>, vector<32x256xf32>, vector<32x256xf32> -> vector<32x256xf32>
    %76 = vector.extract_strided_slice %5 {offsets = [0, 1], sizes = [32, 1], strides = [1, 1]} : vector<32x3xf32> to vector<32x1xf32>
    %77 = vector.broadcast %76 : vector<32x1xf32> to vector<32x256xf32>
    %78 = arith.addf %75, %77 : vector<32x256xf32>
    %79 = math.tanh %78 : vector<32x256xf32>
    %cst_21 = arith.constant dense<0.000000e+00> : vector<1x256xf32>
    %80 = tpu.matmul %4, %79, %cst_21 {dimension_numbers = #tpu.dot_dimension_numbers<[1], [0], [0], [1], [0, 0, 1, 1], [], []>} : vector<1x32xf32>, vector<32x256xf32>, vector<1x256xf32> -> vector<1x256xf32>
    %81 = vector.broadcast %6 : vector<1x1xf32> to vector<1x256xf32>
    %82 = arith.addf %80, %81 : vector<1x256xf32>
    %c1_22 = arith.constant 1 : index
    %c0_23 = arith.constant 0 : index
    %c0_24 = arith.constant 0 : index
    %83 = vector.load %arg6[%c1_22, %c0_23, %c0_24] : memref<4x1x256xf32, #tpu.memory_space<vmem>>, vector<1x1x256xf32>
    %84 = vector.shape_cast %83 : vector<1x1x256xf32> to vector<1x256xf32>
    %85 = vector.shape_cast %82 : vector<1x256xf32> to vector<1x1x256xf32>
    tpu.vector_store %arg6[%c1_22, %c0_23, %c0_24], %85 {strides = array<i32>} : memref<4x1x256xf32, #tpu.memory_space<vmem>>, vector<1x1x256xf32>,
    %c2 = arith.constant 2 : index
    %c0_25 = arith.constant 0 : index
    %c0_26 = arith.constant 0 : index
    %86 = vector.load %arg1[%c2, %c0_25, %c0_26] : memref<4x256x2xf32, #tpu.memory_space<vmem>>, vector<1x256x2xf32>
    %87 = vector.shape_cast %86 : vector<1x256x2xf32> to vector<256x2xf32>
    %88 = vector.extract_strided_slice %87 {offsets = [0, 0], sizes = [256, 1], strides = [1, 1]} : vector<256x2xf32> to vector<256x1xf32>
    %89 = vector.extract_strided_slice %2 {offsets = [0, 0], sizes = [1, 32], strides = [1, 1]} : vector<2x32xf32> to vector<1x32xf32>
    %90 = vector.broadcast %88 : vector<256x1xf32> to vector<256x32xf32>
    %91 = vector.broadcast %89 : vector<1x32xf32> to vector<256x32xf32>
    %92 = arith.mulf %90, %91 : vector<256x32xf32>
    %93 = vector.extract_strided_slice %87 {offsets = [0, 1], sizes = [256, 1], strides = [1, 1]} : vector<256x2xf32> to vector<256x1xf32>
    %94 = vector.extract_strided_slice %2 {offsets = [1, 0], sizes = [1, 32], strides = [1, 1]} : vector<2x32xf32> to vector<1x32xf32>
    %95 = vector.broadcast %93 : vector<256x1xf32> to vector<256x32xf32>
    %96 = vector.broadcast %94 : vector<1x32xf32> to vector<256x32xf32>
    %97 = arith.mulf %95, %96 : vector<256x32xf32>
    %98 = arith.addf %92, %97 : vector<256x32xf32>
    %99 = vector.extract_strided_slice %11 {offsets = [2, 0], sizes = [1, 32], strides = [1, 1]} : vector<4x32xf32> to vector<1x32xf32>
    %100 = vector.broadcast %99 : vector<1x32xf32> to vector<256x32xf32>
    %101 = arith.addf %98, %100 : vector<256x32xf32>
    %102 = math.tanh %101 : vector<256x32xf32>
    %103 = vector.extract_strided_slice %7 {offsets = [0, 0, 0], sizes = [1, 32, 32], strides = [1, 1, 1]} : vector<2x32x32xf32> to vector<1x32x32xf32>
    %104 = vector.shape_cast %103 : vector<1x32x32xf32> to vector<32x32xf32>
    %cst_27 = arith.constant dense<0.000000e+00> : vector<32x256xf32>
    %105 = tpu.matmul %104, %102, %cst_27 {dimension_numbers = #tpu.dot_dimension_numbers<[1], [1], [0], [0], [0, 0, 1, 0], [], []>} : vector<32x32xf32>, vector<256x32xf32>, vector<32x256xf32> -> vector<32x256xf32>
    %106 = vector.extract_strided_slice %5 {offsets = [0, 0], sizes = [32, 1], strides = [1, 1]} : vector<32x3xf32> to vector<32x1xf32>
    %107 = vector.broadcast %106 : vector<32x1xf32> to vector<32x256xf32>
    %108 = arith.addf %105, %107 : vector<32x256xf32>
    %109 = math.tanh %108 : vector<32x256xf32>
    %110 = vector.extract_strided_slice %7 {offsets = [1, 0, 0], sizes = [1, 32, 32], strides = [1, 1, 1]} : vector<2x32x32xf32> to vector<1x32x32xf32>
    %111 = vector.shape_cast %110 : vector<1x32x32xf32> to vector<32x32xf32>
    %cst_28 = arith.constant dense<0.000000e+00> : vector<32x256xf32>
    %112 = tpu.matmul %111, %109, %cst_28 {dimension_numbers = #tpu.dot_dimension_numbers<[1], [0], [0], [1], [0, 0, 1, 1], [], []>} : vector<32x32xf32>, vector<32x256xf32>, vector<32x256xf32> -> vector<32x256xf32>
    %113 = vector.extract_strided_slice %5 {offsets = [0, 1], sizes = [32, 1], strides = [1, 1]} : vector<32x3xf32> to vector<32x1xf32>
    %114 = vector.broadcast %113 : vector<32x1xf32> to vector<32x256xf32>
    %115 = arith.addf %112, %114 : vector<32x256xf32>
    %116 = math.tanh %115 : vector<32x256xf32>
    %cst_29 = arith.constant dense<0.000000e+00> : vector<1x256xf32>
    %117 = tpu.matmul %4, %116, %cst_29 {dimension_numbers = #tpu.dot_dimension_numbers<[1], [0], [0], [1], [0, 0, 1, 1], [], []>} : vector<1x32xf32>, vector<32x256xf32>, vector<1x256xf32> -> vector<1x256xf32>
    %118 = vector.broadcast %6 : vector<1x1xf32> to vector<1x256xf32>
    %119 = arith.addf %117, %118 : vector<1x256xf32>
    %c2_30 = arith.constant 2 : index
    %c0_31 = arith.constant 0 : index
    %c0_32 = arith.constant 0 : index
    %120 = vector.load %arg6[%c2_30, %c0_31, %c0_32] : memref<4x1x256xf32, #tpu.memory_space<vmem>>, vector<1x1x256xf32>
    %121 = vector.shape_cast %120 : vector<1x1x256xf32> to vector<1x256xf32>
    %122 = vector.shape_cast %119 : vector<1x256xf32> to vector<1x1x256xf32>
    tpu.vector_store %arg6[%c2_30, %c0_31, %c0_32], %122 {strides = array<i32>} : memref<4x1x256xf32, #tpu.memory_space<vmem>>, vector<1x1x256xf32>,
    %c3 = arith.constant 3 : index
    %c0_33 = arith.constant 0 : index
    %c0_34 = arith.constant 0 : index
    %123 = vector.load %arg1[%c3, %c0_33, %c0_34] : memref<4x256x2xf32, #tpu.memory_space<vmem>>, vector<1x256x2xf32>
    %124 = vector.shape_cast %123 : vector<1x256x2xf32> to vector<256x2xf32>
    %125 = vector.extract_strided_slice %124 {offsets = [0, 0], sizes = [256, 1], strides = [1, 1]} : vector<256x2xf32> to vector<256x1xf32>
    %126 = vector.extract_strided_slice %2 {offsets = [0, 0], sizes = [1, 32], strides = [1, 1]} : vector<2x32xf32> to vector<1x32xf32>
    %127 = vector.broadcast %125 : vector<256x1xf32> to vector<256x32xf32>
    %128 = vector.broadcast %126 : vector<1x32xf32> to vector<256x32xf32>
    %129 = arith.mulf %127, %128 : vector<256x32xf32>
    %130 = vector.extract_strided_slice %124 {offsets = [0, 1], sizes = [256, 1], strides = [1, 1]} : vector<256x2xf32> to vector<256x1xf32>
    %131 = vector.extract_strided_slice %2 {offsets = [1, 0], sizes = [1, 32], strides = [1, 1]} : vector<2x32xf32> to vector<1x32xf32>
    %132 = vector.broadcast %130 : vector<256x1xf32> to vector<256x32xf32>
    %133 = vector.broadcast %131 : vector<1x32xf32> to vector<256x32xf32>
    %134 = arith.mulf %132, %133 : vector<256x32xf32>
    %135 = arith.addf %129, %134 : vector<256x32xf32>
    %136 = vector.extract_strided_slice %11 {offsets = [3, 0], sizes = [1, 32], strides = [1, 1]} : vector<4x32xf32> to vector<1x32xf32>
    %137 = vector.broadcast %136 : vector<1x32xf32> to vector<256x32xf32>
    %138 = arith.addf %135, %137 : vector<256x32xf32>
    %139 = math.tanh %138 : vector<256x32xf32>
    %140 = vector.extract_strided_slice %7 {offsets = [0, 0, 0], sizes = [1, 32, 32], strides = [1, 1, 1]} : vector<2x32x32xf32> to vector<1x32x32xf32>
    %141 = vector.shape_cast %140 : vector<1x32x32xf32> to vector<32x32xf32>
    %cst_35 = arith.constant dense<0.000000e+00> : vector<32x256xf32>
    %142 = tpu.matmul %141, %139, %cst_35 {dimension_numbers = #tpu.dot_dimension_numbers<[1], [1], [0], [0], [0, 0, 1, 0], [], []>} : vector<32x32xf32>, vector<256x32xf32>, vector<32x256xf32> -> vector<32x256xf32>
    %143 = vector.extract_strided_slice %5 {offsets = [0, 0], sizes = [32, 1], strides = [1, 1]} : vector<32x3xf32> to vector<32x1xf32>
    %144 = vector.broadcast %143 : vector<32x1xf32> to vector<32x256xf32>
    %145 = arith.addf %142, %144 : vector<32x256xf32>
    %146 = math.tanh %145 : vector<32x256xf32>
    %147 = vector.extract_strided_slice %7 {offsets = [1, 0, 0], sizes = [1, 32, 32], strides = [1, 1, 1]} : vector<2x32x32xf32> to vector<1x32x32xf32>
    %148 = vector.shape_cast %147 : vector<1x32x32xf32> to vector<32x32xf32>
    %cst_36 = arith.constant dense<0.000000e+00> : vector<32x256xf32>
    %149 = tpu.matmul %148, %146, %cst_36 {dimension_numbers = #tpu.dot_dimension_numbers<[1], [0], [0], [1], [0, 0, 1, 1], [], []>} : vector<32x32xf32>, vector<32x256xf32>, vector<32x256xf32> -> vector<32x256xf32>
    %150 = vector.extract_strided_slice %5 {offsets = [0, 1], sizes = [32, 1], strides = [1, 1]} : vector<32x3xf32> to vector<32x1xf32>
    %151 = vector.broadcast %150 : vector<32x1xf32> to vector<32x256xf32>
    %152 = arith.addf %149, %151 : vector<32x256xf32>
    %153 = math.tanh %152 : vector<32x256xf32>
    %cst_37 = arith.constant dense<0.000000e+00> : vector<1x256xf32>
    %154 = tpu.matmul %4, %153, %cst_37 {dimension_numbers = #tpu.dot_dimension_numbers<[1], [0], [0], [1], [0, 0, 1, 1], [], []>} : vector<1x32xf32>, vector<32x256xf32>, vector<1x256xf32> -> vector<1x256xf32>
    %155 = vector.broadcast %6 : vector<1x1xf32> to vector<1x256xf32>
    %156 = arith.addf %154, %155 : vector<1x256xf32>
    %c3_38 = arith.constant 3 : index
    %c0_39 = arith.constant 0 : index
    %c0_40 = arith.constant 0 : index
    %157 = vector.load %arg6[%c3_38, %c0_39, %c0_40] : memref<4x1x256xf32, #tpu.memory_space<vmem>>, vector<1x1x256xf32>
    %158 = vector.shape_cast %157 : vector<1x1x256xf32> to vector<1x256xf32>
    %159 = vector.shape_cast %156 : vector<1x256xf32> to vector<1x1x256xf32>
    tpu.vector_store %arg6[%c3_38, %c0_39, %c0_40], %159 {strides = array<i32>} : memref<4x1x256xf32, #tpu.memory_space<vmem>>, vector<1x1x256xf32>,
    return
  }
  func.func @transform_0(%arg0: i32) -> (i32, i32, i32) {
    %c0_i32 = arith.constant 0 : i32
    %c0_i32_0 = arith.constant 0 : i32
    %c0_i32_1 = arith.constant 0 : i32
    return %c0_i32, %arg0, %c0_i32_0 : i32, i32, i32
  }
  func.func @transform_1(%arg0: i32) -> (i32, i32) {
    %c0_i32 = arith.constant 0 : i32
    %c0_i32_0 = arith.constant 0 : i32
    %c0_i32_1 = arith.constant 0 : i32
    return %c0_i32, %c0_i32_0 : i32, i32
  }
  func.func @transform_2(%arg0: i32) -> (i32, i32) {
    %c0_i32 = arith.constant 0 : i32
    %c0_i32_0 = arith.constant 0 : i32
    %c0_i32_1 = arith.constant 0 : i32
    return %c0_i32, %c0_i32_0 : i32, i32
  }
  func.func @transform_3(%arg0: i32) -> (i32, i32) {
    %c0_i32 = arith.constant 0 : i32
    %c0_i32_0 = arith.constant 0 : i32
    %c0_i32_1 = arith.constant 0 : i32
    return %c0_i32, %c0_i32_0 : i32, i32
  }
  func.func @transform_4(%arg0: i32) -> (i32, i32, i32) {
    %c0_i32 = arith.constant 0 : i32
    %c0_i32_0 = arith.constant 0 : i32
    %c0_i32_1 = arith.constant 0 : i32
    %c0_i32_2 = arith.constant 0 : i32
    return %c0_i32, %c0_i32_0, %c0_i32_1 : i32, i32, i32
  }
  func.func @transform_5(%arg0: i32) -> (i32, i32, i32) {
    %c0_i32 = arith.constant 0 : i32
    %c0_i32_0 = arith.constant 0 : i32
    %c0_i32_1 = arith.constant 0 : i32
    return %c0_i32, %c0_i32_0, %arg0 : i32, i32, i32
  }
}

</mosaic_0001>

<llo_original>
// kernel: mad_pinn_forward.1
$region0: #{mad_pinn_forward.1}
  #allocation0 [shape = 'u32[]', space=smem, size = 0x4, offset = 0x4, fixed_abs, tag = 'smem constant byte address 0x4 - core index']
  #allocation1 [shape = 'u32[72,128]{1,0:T(1,128)}', space=vmem, size = 0x9000, scoped, tag = 'internal scratch']
  %s0 = inlined_call_operand.vmem [shape: f32[4,256,2], index: 0, kind: input, shape index: {}]
  %s1 = inlined_call_operand.vmem [shape: f32[4,16], index: 1, kind: input, shape index: {}]
  %s2 = inlined_call_operand.vmem [shape: f32[20,32], index: 2, kind: input, shape index: {}]
  %s3 = inlined_call_operand.vmem [shape: f32[32,3], index: 3, kind: input, shape index: {}]
  %s4 = inlined_call_operand.vmem [shape: f32[2,32,32], index: 4, kind: input, shape index: {}]
  %s5 = inlined_call_operand.hbm [shape: f32[4,1,256], index: 5, kind: output, shape index: {}]
  %s6 = sld [smem:[#allocation0]]
  $region30: #{mad_pinn_forward.1} parent=0
    _
  %s8 = ssub.s32 1, %s6
  %s9 = scalar_select 0, %s8, %s6
  $region1: #{mad_pinn_forward.1} parent=0
    #allocation2 [shape = 'u8[4096]{0}', space=vmem, size = 0x1000, scoped, tag = 'output window, operand 0, single buffered']
    #allocation3 [shape = 's32[1]{0}', space=sflag, size = 0x4, scoped, tag = 'scoped memory for mad_pinn_forward.1']
    %10 = vsyncpa [#allocation3], 0
    // Predicated region
    $region2: #{mad_pinn_forward.1} parent=1 // pred_check
      _
    $region3: #{mad_pinn_forward.1} parent=1 // pred_check_branch
      %12 = sbr.rel (0) target = $region5
    $region4: #{mad_pinn_forward.1} parent=1 // pred_region
      _
    $region5: #{mad_pinn_forward.1} parent=1 // pred_fallthru
      _
    // Predicated region
    $region6: #{mad_pinn_forward.1} parent=1 // pred_check
      _
    $region7: #{mad_pinn_forward.1} parent=1 // pred_check_branch
      %14 = sbr.rel (0) target = $region9
    $region8: #{mad_pinn_forward.1} parent=1 // pred_region
      _
    $region9: #{mad_pinn_forward.1} parent=1 // pred_fallthru
      _
    // Predicated region
    $region10: #{mad_pinn_forward.1} parent=1 // pred_check
      _
    $region11: #{mad_pinn_forward.1} parent=1 // pred_check_branch
      %16 = sbr.rel (0) target = $region13
    $region12: #{mad_pinn_forward.1} parent=1 // pred_region
      _
    $region13: #{mad_pinn_forward.1} parent=1 // pred_fallthru
      _
    // Predicated region
    $region14: #{mad_pinn_forward.1} parent=1 // pred_check
      _
    $region15: #{mad_pinn_forward.1} parent=1 // pred_check_branch
      %18 = sbr.rel (0) target = $region17
    $region16: #{mad_pinn_forward.1} parent=1 // pred_region
      _
    $region17: #{mad_pinn_forward.1} parent=1 // pred_fallthru
      _
    // Predicated region
    $region18: #{mad_pinn_forward.1} parent=1 // pred_check
      _
    $region19: #{mad_pinn_forward.1} parent=1 // pred_check_branch
      %20 = sbr.rel (0) target = $region21
    $region20: #{mad_pinn_forward.1} parent=1 // pred_region
      _
    $region21: #{mad_pinn_forward.1} parent=1 // pred_fallthru
      _
    %v21 = vld [vmem:[%s2] sm:$0xff]
    %v22 = vld [vmem:[%s2 + $0x8] sm:$0xff]
    %v23 = vld [vmem:[%s2 + $0x10] sm:$0xf]
    %v24 = vld [vmem:[%s3] sm:$0xff]
    %v25 = vld [vmem:[%s3 + $0x8] sm:$0xff]
    %v26 = vld [vmem:[%s3 + $0x10] sm:$0xff]
    %v27 = vld [vmem:[%s3 + $0x18] sm:$0xff]
    %v28 = vld [vmem:[%s4] sm:$0xff]
    %v29 = vld [vmem:[%s4 + $0x8] sm:$0xff]
    %v30 = vld [vmem:[%s4 + $0x10] sm:$0xff]
    %v31 = vld [vmem:[%s4 + $0x18] sm:$0xff]
    %v32 = vld [vmem:[%s4 + $0x20] sm:$0xff]
    %v33 = vld [vmem:[%s4 + $0x28] sm:$0xff]
    %v34 = vld [vmem:[%s4 + $0x30] sm:$0xff]
    %v35 = vld [vmem:[%s4 + $0x38] sm:$0xff]
    %v36 = vld [vmem:[%s1] sm:$0xf]
    %vm37 = vcmask 130048
    %v39 = vsel %vm37, %v36, 0
    %41 = vmatpush.msra.mxu0 0.0
    %42 = vmatpush.msra.mxu0 0.0
    %43 = vmatpush.msra.mxu0 0.0
    %44 = vmatpush.msra.mxu0 0.0
    %45 = vmatpush.msra.mxu0 0.0
    %46 = vmatpush.msra.mxu0 0.0
    %47 = vmatpush.msra.mxu0 0.0
    %48 = vmatpush.msra.mxu0 0.0
    %49 = vmatpush.msra.mxu0 0.0
    %50 = vmatpush.msra.mxu0 0.0
    %51 = vmatpush.msra.mxu0 0.0
    %52 = vmatpush.msra.mxu0 0.0
    %53 = vmatpush.msra.mxu0 0.0
    %54 = vmatpush.msra.mxu0 0.0
    %55 = vmatpush.msra.mxu0 %v22
    %56 = vmatpush.msra.mxu0 %v21
    %57 = vmatmul.f32.gmra.mxu0 %v39
    %v58 = vpop.f32.mrf.mxu0
    %v59 = vadd.f32 0.0, %v58
    %60 = vdwg.mxu0
    %v61 = vperm.slane %v23, 2
    %v62 = vadd.f32 %v61, %v59
    %v63 = vld [vmem:[%s0] sm:$0xff]
    %v64 = vld [vmem:[%s0 + $0x8] sm:$0xff]
    %v65 = vld [vmem:[%s0 + $0x10] sm:$0xff]
    %v66 = vld [vmem:[%s0 + $0x18] sm:$0xff]
    %v67 = vld [vmem:[%s0 + $0x20] sm:$0xff]
    %v68 = vld [vmem:[%s0 + $0x28] sm:$0xff]
    %v69 = vld [vmem:[%s0 + $0x30] sm:$0xff]
    %v70 = vld [vmem:[%s0 + $0x38] sm:$0xff]
    %v71 = vld [vmem:[%s0 + $0x40] sm:$0xff]
    %v72 = vld [vmem:[%s0 + $0x48] sm:$0xff]
    %v73 = vld [vmem:[%s0 + $0x50] sm:$0xff]
    %v74 = vld [vmem:[%s0 + $0x58] sm:$0xff]
    %v75 = vld [vmem:[%s0 + $0x60] sm:$0xff]
    %v76 = vld [vmem:[%s0 + $0x68] sm:$0xff]
    %v77 = vld [vmem:[%s0 + $0x70] sm:$0xff]
    %v78 = vld [vmem:[%s0 + $0x78] sm:$0xff]
    %v79 = vld [vmem:[%s0 + $0x80] sm:$0xff]
    %v80 = vld [vmem:[%s0 + $0x88] sm:$0xff]
    %v81 = vld [vmem:[%s0 + $0x90] sm:$0xff]
    %v82 = vld [vmem:[%s0 + $0x98] sm:$0xff]
    %v83 = vld [vmem:[%s0 + $0xa0] sm:$0xff]
    %v84 = vld [vmem:[%s0 + $0xa8] sm:$0xff]
    %v85 = vld [vmem:[%s0 + $0xb0] sm:$0xff]
    %v86 = vld [vmem:[%s0 + $0xb8] sm:$0xff]
    %v87 = vld [vmem:[%s0 + $0xc0] sm:$0xff]
    %v88 = vld [vmem:[%s0 + $0xc8] sm:$0xff]
    %v89 = vld [vmem:[%s0 + $0xd0] sm:$0xff]
    %v90 = vld [vmem:[%s0 + $0xd8] sm:$0xff]
    %v91 = vld [vmem:[%s0 + $0xe0] sm:$0xff]
    %v92 = vld [vmem:[%s0 + $0xe8] sm:$0xff]
    %v93 = vld [vmem:[%s0 + $0xf0] sm:$0xff]
    %v94 = vld [vmem:[%s0 + $0xf8] sm:$0xff]
    %96 = vset.pattern.permute.xlu0 0
    %97 = vperm.xlu0 %96, %v63
    %v98 = vpop.permute.xlu0 %97
    %101 = vset.pattern.permute.xlu0 0
    %102 = vperm.xlu0 %101, %v64
    %v103 = vpop.permute.xlu0 %102
    %106 = vset.pattern.permute.xlu0 0
    %107 = vperm.xlu0 %106, %v65
    %v108 = vpop.permute.xlu0 %107
    %111 = vset.pattern.permute.xlu0 0
    %112 = vperm.xlu0 %111, %v66
    %v113 = vpop.permute.xlu0 %112
    %116 = vset.pattern.permute.xlu0 0
    %117 = vperm.xlu0 %116, %v67
    %v118 = vpop.permute.xlu0 %117
    %121 = vset.pattern.permute.xlu0 0
    %122 = vperm.xlu0 %121, %v68
    %v123 = vpop.permute.xlu0 %122
    %126 = vset.pattern.permute.xlu0 0
    %127 = vperm.xlu0 %126, %v69
    %v128 = vpop.permute.xlu0 %127
    %131 = vset.pattern.permute.xlu0 0
    %132 = vperm.xlu0 %131, %v70
    %v133 = vpop.permute.xlu0 %132
    %136 = vset.pattern.permute.xlu0 0
    %137 = vperm.xlu0 %136, %v71
    %v138 = vpop.permute.xlu0 %137
    %141 = vset.pattern.permute.xlu0 0
    %142 = vperm.xlu0 %141, %v72
    %v143 = vpop.permute.xlu0 %142
    %146 = vset.pattern.permute.xlu0 0
    %147 = vperm.xlu0 %146, %v73
    %v148 = vpop.permute.xlu0 %147
    %151 = vset.pattern.permute.xlu0 0
    %152 = vperm.xlu0 %151, %v74
    %v153 = vpop.permute.xlu0 %152
    %156 = vset.pattern.permute.xlu0 0
    %157 = vperm.xlu0 %156, %v75
    %v158 = vpop.permute.xlu0 %157
    %161 = vset.pattern.permute.xlu0 0
    %162 = vperm.xlu0 %161, %v76
    %v163 = vpop.permute.xlu0 %162
    %166 = vset.pattern.permute.xlu0 0
    %167 = vperm.xlu0 %166, %v77
    %v168 = vpop.permute.xlu0 %167
    %171 = vset.pattern.permute.xlu0 0
    %172 = vperm.xlu0 %171, %v78
    %v173 = vpop.permute.xlu0 %172
    %176 = vset.pattern.permute.xlu0 0
    %177 = vperm.xlu0 %176, %v79
    %v178 = vpop.permute.xlu0 %177
    %181 = vset.pattern.permute.xlu0 0
    %182 = vperm.xlu0 %181, %v80
    %v183 = vpop.permute.xlu0 %182
    %186 = vset.pattern.permute.xlu0 0
    %187 = vperm.xlu0 %186, %v81
    %v188 = vpop.permute.xlu0 %187
    %191 = vset.pattern.permute.xlu0 0
    %192 = vperm.xlu0 %191, %v82
    %v193 = vpop.permute.xlu0 %192
    %196 = vset.pattern.permute.xlu0 0
    %197 = vperm.xlu0 %196, %v83
    %v198 = vpop.permute.xlu0 %197
    %201 = vset.pattern.permute.xlu0 0
    %202 = vperm.xlu0 %201, %v84
    %v203 = vpop.permute.xlu0 %202
    %206 = vset.pattern.permute.xlu0 0
    %207 = vperm.xlu0 %206, %v85
    %v208 = vpop.permute.xlu0 %207
    %211 = vset.pattern.permute.xlu0 0
    %212 = vperm.xlu0 %211, %v86
    %v213 = vpop.permute.xlu0 %212
    %216 = vset.pattern.permute.xlu0 0
    %217 = vperm.xlu0 %216, %v87
    %v218 = vpop.permute.xlu0 %217
    %221 = vset.pattern.permute.xlu0 0
    %222 = vperm.xlu0 %221, %v88
    %v223 = vpop.permute.xlu0 %222
    %226 = vset.pattern.permute.xlu0 0
    %227 = vperm.xlu0 %226, %v89
    %v228 = vpop.permute.xlu0 %227
    %231 = vset.pattern.permute.xlu0 0
    %232 = vperm.xlu0 %231, %v90
    %v233 = vpop.permute.xlu0 %232
    %236 = vset.pattern.permute.xlu0 0
    %237 = vperm.xlu0 %236, %v91
    %v238 = vpop.permute.xlu0 %237
    %241 = vset.pattern.permute.xlu0 0
    %242 = vperm.xlu0 %241, %v92
    %v243 = vpop.permute.xlu0 %242
    %246 = vset.pattern.permute.xlu0 0
    %247 = vperm.xlu0 %246, %v93
    %v248 = vpop.permute.xlu0 %247
    %251 = vset.pattern.permute.xlu0 0
    %252 = vperm.xlu0 %251, %v94
    %v253 = vpop.permute.xlu0 %252
    %v255 = vperm.slane %v23, 0
    %v256 = vmul.f32 %v98, %v255
    %v257 = vmul.f32 %v103, %v255
    %v258 = vmul.f32 %v108, %v255
    %v259 = vmul.f32 %v113, %v255
    %v260 = vmul.f32 %v118, %v255
    %v261 = vmul.f32 %v123, %v255
    %v262 = vmul.f32 %v128, %v255
    %v263 = vmul.f32 %v133, %v255
    %v264 = vmul.f32 %v138, %v255
    %v265 = vmul.f32 %v143, %v255
    %v266 = vmul.f32 %v148, %v255
    %v267 = vmul.f32 %v153, %v255
    %v268 = vmul.f32 %v158, %v255
    %v269 = vmul.f32 %v163, %v255
    %v270 = vmul.f32 %v168, %v255
    %v271 = vmul.f32 %v173, %v255
    %v272 = vmul.f32 %v178, %v255
    %v273 = vmul.f32 %v183, %v255
    %v274 = vmul.f32 %v188, %v255
    %v275 = vmul.f32 %v193, %v255
    %v276 = vmul.f32 %v198, %v255
    %v277 = vmul.f32 %v203, %v255
    %v278 = vmul.f32 %v208, %v255
    %v279 = vmul.f32 %v213, %v255
    %v280 = vmul.f32 %v218, %v255
    %v281 = vmul.f32 %v223, %v255
    %v282 = vmul.f32 %v228, %v255
    %v283 = vmul.f32 %v233, %v255
    %v284 = vmul.f32 %v238, %v255
    %v285 = vmul.f32 %v243, %v255
    %v286 = vmul.f32 %v248, %v255
    %v287 = vmul.f32 %v253, %v255
    %288 = vset.pattern.permute.xlu0 1
    %289 = vperm.xlu0 %288, %v63
    %v290 = vpop.permute.xlu0 %289
    %292 = vset.pattern.permute.xlu0 1
    %293 = vperm.xlu0 %292, %v64
    %v294 = vpop.permute.xlu0 %293
    %296 = vset.pattern.permute.xlu0 1
    %297 = vperm.xlu0 %296, %v65
    %v298 = vpop.permute.xlu0 %297
    %300 = vset.pattern.permute.xlu0 1
    %301 = vperm.xlu0 %300, %v66
    %v302 = vpop.permute.xlu0 %301
    %304 = vset.pattern.permute.xlu0 1
    %305 = vperm.xlu0 %304, %v67
    %v306 = vpop.permute.xlu0 %305
    %308 = vset.pattern.permute.xlu0 1
    %309 = vperm.xlu0 %308, %v68
    %v310 = vpop.permute.xlu0 %309
    %312 = vset.pattern.permute.xlu0 1
    %313 = vperm.xlu0 %312, %v69
    %v314 = vpop.permute.xlu0 %313
    %316 = vset.pattern.permute.xlu0 1
    %317 = vperm.xlu0 %316, %v70
    %v318 = vpop.permute.xlu0 %317
    %320 = vset.pattern.permute.xlu0 1
    %321 = vperm.xlu0 %320, %v71
    %v322 = vpop.permute.xlu0 %321
    %324 = vset.pattern.permute.xlu0 1
    %325 = vperm.xlu0 %324, %v72
    %v326 = vpop.permute.xlu0 %325
    %328 = vset.pattern.permute.xlu0 1
    %329 = vperm.xlu0 %328, %v73
    %v330 = vpop.permute.xlu0 %329
    %332 = vset.pattern.permute.xlu0 1
    %333 = vperm.xlu0 %332, %v74
    %v334 = vpop.permute.xlu0 %333
    %336 = vset.pattern.permute.xlu0 1
    %337 = vperm.xlu0 %336, %v75
    %v338 = vpop.permute.xlu0 %337
    %340 = vset.pattern.permute.xlu0 1
    %341 = vperm.xlu0 %340, %v76
    %v342 = vpop.permute.xlu0 %341
    %344 = vset.pattern.permute.xlu0 1
    %345 = vperm.xlu0 %344, %v77
    %v346 = vpop.permute.xlu0 %345
    %348 = vset.pattern.permute.xlu0 1
    %349 = vperm.xlu0 %348, %v78
    %v350 = vpop.permute.xlu0 %349
    %352 = vset.pattern.permute.xlu0 1
    %353 = vperm.xlu0 %352, %v79
    %v354 = vpop.permute.xlu0 %353
    %356 = vset.pattern.permute.xlu0 1
    %357 = vperm.xlu0 %356, %v80
    %v358 = vpop.permute.xlu0 %357
    %360 = vset.pattern.permute.xlu0 1
    %361 = vperm.xlu0 %360, %v81
    %v362 = vpop.permute.xlu0 %361
    %364 = vset.pattern.permute.xlu0 1
    %365 = vperm.xlu0 %364, %v82
    %v366 = vpop.permute.xlu0 %365
    %368 = vset.pattern.permute.xlu0 1
    %369 = vperm.xlu0 %368, %v83
    %v370 = vpop.permute.xlu0 %369
    %372 = vset.pattern.permute.xlu0 1
    %373 = vperm.xlu0 %372, %v84
    %v374 = vpop.permute.xlu0 %373
    %376 = vset.pattern.permute.xlu0 1
    %377 = vperm.xlu0 %376, %v85
    %v378 = vpop.permute.xlu0 %377
    %380 = vset.pattern.permute.xlu0 1
    %381 = vperm.xlu0 %380, %v86
    %v382 = vpop.permute.xlu0 %381
    %384 = vset.pattern.permute.xlu0 1
    %385 = vperm.xlu0 %384, %v87
    %v386 = vpop.permute.xlu0 %385
    %388 = vset.pattern.permute.xlu0 1
    %389 = vperm.xlu0 %388, %v88
    %v390 = vpop.permute.xlu0 %389
    %392 = vset.pattern.permute.xlu0 1
    %393 = vperm.xlu0 %392, %v89
    %v394 = vpop.permute.xlu0 %393
    %396 = vset.pattern.permute.xlu0 1
    %397 = vperm.xlu0 %396, %v90
    %v398 = vpop.permute.xlu0 %397
    %400 = vset.pattern.permute.xlu0 1
    %401 = vperm.xlu0 %400, %v91
    %v402 = vpop.permute.xlu0 %401
    %404 = vset.pattern.permute.xlu0 1
    %405 = vperm.xlu0 %404, %v92
    %v406 = vpop.permute.xlu0 %405
    %408 = vset.pattern.permute.xlu0 1
    %409 = vperm.xlu0 %408, %v93
    %v410 = vpop.permute.xlu0 %409
    %412 = vset.pattern.permute.xlu0 1
    %413 = vperm.xlu0 %412, %v94
    %v414 = vpop.permute.xlu0 %413
    %v416 = vperm.slane %v23, 1
    %v417 = vmul.f32 %v290, %v416
    %v418 = vmul.f32 %v294, %v416
    %v419 = vmul.f32 %v298, %v416
    %v420 = vmul.f32 %v302, %v416
    %v421 = vmul.f32 %v306, %v416
    %v422 = vmul.f32 %v310, %v416
    %v423 = vmul.f32 %v314, %v416
    %v424 = vmul.f32 %v318, %v416
    %v425 = vmul.f32 %v322, %v416
    %v426 = vmul.f32 %v326, %v416
    %v427 = vmul.f32 %v330, %v416
    %v428 = vmul.f32 %v334, %v416
    %v429 = vmul.f32 %v338, %v416
    %v430 = vmul.f32 %v342, %v416
    %v431 = vmul.f32 %v346, %v416
    %v432 = vmul.f32 %v350, %v416
    %v433 = vmul.f32 %v354, %v416
    %v434 = vmul.f32 %v358, %v416
    %v435 = vmul.f32 %v362, %v416
    %v436 = vmul.f32 %v366, %v416
    %v437 = vmul.f32 %v370, %v416
    %v438 = vmul.f32 %v374, %v416
    %v439 = vmul.f32 %v378, %v416
    %v440 = vmul.f32 %v382, %v416
    %v441 = vmul.f32 %v386, %v416
    %v442 = vmul.f32 %v390, %v416
    %v443 = vmul.f32 %v394, %v416
    %v444 = vmul.f32 %v398, %v416
    %v445 = vmul.f32 %v402, %v416
    %v446 = vmul.f32 %v406, %v416
    %v447 = vmul.f32 %v410, %v416
    %v448 = vmul.f32 %v414, %v416
    %v449 = vadd.f32 %v256, %v417
    %v450 = vadd.f32 %v257, %v418
    %v451 = vadd.f32 %v258, %v419
    %v452 = vadd.f32 %v259, %v420
    %v453 = vadd.f32 %v260, %v421
    %v454 = vadd.f32 %v261, %v422
    %v455 = vadd.f32 %v262, %v423
    %v456 = vadd.f32 %v263, %v424
    %v457 = vadd.f32 %v264, %v425
    %v458 = vadd.f32 %v265, %v426
    %v459 = vadd.f32 %v266, %v427
    %v460 = vadd.f32 %v267, %v428
    %v461 = vadd.f32 %v268, %v429
    %v462 = vadd.f32 %v269, %v430
    %v463 = vadd.f32 %v270, %v431
    %v464 = vadd.f32 %v271, %v432
    %v465 = vadd.f32 %v272, %v433
    %v466 = vadd.f32 %v273, %v434
    %v467 = vadd.f32 %v274, %v435
    %v468 = vadd.f32 %v275, %v436
    %v469 = vadd.f32 %v276, %v437
    %v470 = vadd.f32 %v277, %v438
    %v471 = vadd.f32 %v278, %v439
    %v472 = vadd.f32 %v279, %v440
    %v473 = vadd.f32 %v280, %v441
    %v474 = vadd.f32 %v281, %v442
    %v475 = vadd.f32 %v282, %v443
    %v476 = vadd.f32 %v283, %v444
    %v477 = vadd.f32 %v284, %v445
    %v478 = vadd.f32 %v285, %v446
    %v479 = vadd.f32 %v286, %v447
    %v480 = vadd.f32 %v287, %v448
    %v481 = vperm.slane %v62, 0
    %v482 = vadd.f32 %v449, %v481
    %v483 = vadd.f32 %v450, %v481
    %v484 = vadd.f32 %v451, %v481
    %v485 = vadd.f32 %v452, %v481
    %v486 = vadd.f32 %v453, %v481
    %v487 = vadd.f32 %v454, %v481
    %v488 = vadd.f32 %v455, %v481
    %v489 = vadd.f32 %v456, %v481
    %v490 = vadd.f32 %v457, %v481
    %v491 = vadd.f32 %v458, %v481
    %v492 = vadd.f32 %v459, %v481
    %v493 = vadd.f32 %v460, %v481
    %v494 = vadd.f32 %v461, %v481
    %v495 = vadd.f32 %v462, %v481
    %v496 = vadd.f32 %v463, %v481
    %v497 = vadd.f32 %v464, %v481
    %v498 = vadd.f32 %v465, %v481
    %v499 = vadd.f32 %v466, %v481
    %v500 = vadd.f32 %v467, %v481
    %v501 = vadd.f32 %v468, %v481
    %v502 = vadd.f32 %v469, %v481
    %v503 = vadd.f32 %v470, %v481
    %v504 = vadd.f32 %v471, %v481
    %v505 = vadd.f32 %v472, %v481
    %v506 = vadd.f32 %v473, %v481
    %v507 = vadd.f32 %v474, %v481
    %v508 = vadd.f32 %v475, %v481
    %v509 = vadd.f32 %v476, %v481
    %v510 = vadd.f32 %v477, %v481
    %v511 = vadd.f32 %v478, %v481
    %v512 = vadd.f32 %v479, %v481
    %v513 = vadd.f32 %v480, %v481
    %v514 = vtanh.pop %v482
    %v515 = vtanh.pop %v483
    %v516 = vtanh.pop %v484
    %v517 = vtanh.pop %v485
    %v518 = vtanh.pop %v486
    %v519 = vtanh.pop %v487
    %v520 = vtanh.pop %v488
    %v521 = vtanh.pop %v489
    %v522 = vtanh.pop %v490
    %v523 = vtanh.pop %v491
    %v524 = vtanh.pop %v492
    %v525 = vtanh.pop %v493
    %v526 = vtanh.pop %v494
    %v527 = vtanh.pop %v495
    %v528 = vtanh.pop %v496
    %v529 = vtanh.pop %v497
    %v530 = vtanh.pop %v498
    %v531 = vtanh.pop %v499
    %v532 = vtanh.pop %v500
    %v533 = vtanh.pop %v501
    %v534 = vtanh.pop %v502
    %v535 = vtanh.pop %v503
    %v536 = vtanh.pop %v504
    %v537 = vtanh.pop %v505
    %v538 = vtanh.pop %v506
    %v539 = vtanh.pop %v507
    %v540 = vtanh.pop %v508
    %v541 = vtanh.pop %v509
    %v542 = vtanh.pop %v510
    %v543 = vtanh.pop %v511
    %v544 = vtanh.pop %v512
    %v545 = vtanh.pop %v513
    %547 = vset.pattern.permute.xlu0 0
    %548 = vperm.xlu0 %547, %v24
    %v549 = vpop.permute.xlu0 %548
    %552 = vset.pattern.permute.xlu0 0
    %553 = vperm.xlu0 %552, %v25
    %v554 = vpop.permute.xlu0 %553
    %557 = vset.pattern.permute.xlu0 0
    %558 = vperm.xlu0 %557, %v26
    %v559 = vpop.permute.xlu0 %558
    %562 = vset.pattern.permute.xlu0 0
    %563 = vperm.xlu0 %562, %v27
    %v564 = vpop.permute.xlu0 %563
    %vm566 = vcmask 261120
    %v568 = vsel %vm566, %v28, 0
    %v571 = vsel %vm566, %v29, 0
    %v574 = vsel %vm566, %v30, 0
    %v577 = vsel %vm566, %v31, 0
    %v580 = vsel %vm566, %v514, 0
    %v583 = vsel %vm566, %v515, 0
    %v586 = vsel %vm566, %v516, 0
    %v589 = vsel %vm566, %v517, 0
    %v592 = vsel %vm566, %v518, 0
    %v595 = vsel %vm566, %v519, 0
    %v598 = vsel %vm566, %v520, 0
    %v601 = vsel %vm566, %v521, 0
    %v604 = vsel %vm566, %v522, 0
    %v607 = vsel %vm566, %v523, 0
    %v610 = vsel %vm566, %v524, 0
    %v613 = vsel %vm566, %v525, 0
    %v616 = vsel %vm566, %v526, 0
    %v619 = vsel %vm566, %v527, 0
    %v622 = vsel %vm566, %v528, 0
    %v625 = vsel %vm566, %v529, 0
    %v628 = vsel %vm566, %v530, 0
    %v631 = vsel %vm566, %v531, 0
    %v634 = vsel %vm566, %v532, 0
    %v637 = vsel %vm566, %v533, 0
    %v640 = vsel %vm566, %v534, 0
    %v643 = vsel %vm566, %v535, 0
    %v646 = vsel %vm566, %v536, 0
    %v649 = vsel %vm566, %v537, 0
    %v652 = vsel %vm566, %v538, 0
    %v655 = vsel %vm566, %v539, 0
    %v658 = vsel %vm566, %v540, 0
    %v661 = vsel %vm566, %v541, 0
    %v664 = vsel %vm566, %v542, 0
    %v667 = vsel %vm566, %v543, 0
    %v670 = vsel %vm566, %v544, 0
    %v673 = vsel %vm566, %v545, 0
    %675 = vmatpush.xpose.msra.mxu0 %v625
    %676 = vmatpush.xpose.msra.mxu0 %v622
    %677 = vmatpush.xpose.msra.mxu0 %v619
    %678 = vmatpush.xpose.msra.mxu0 %v616
    %679 = vmatpush.xpose.msra.mxu0 %v613
    %680 = vmatpush.xpose.msra.mxu0 %v610
    %681 = vmatpush.xpose.msra.mxu0 %v607
    %682 = vmatpush.xpose.msra.mxu0 %v604
    %683 = vmatpush.xpose.msra.mxu0 %v601
    %684 = vmatpush.xpose.msra.mxu0 %v598
    %685 = vmatpush.xpose.msra.mxu0 %v595
    %686 = vmatpush.xpose.msra.mxu0 %v592
    %687 = vmatpush.xpose.msra.mxu0 %v589
    %688 = vmatpush.xpose.msra.mxu0 %v586
    %689 = vmatpush.xpose.msra.mxu0 %v583
    %690 = vmatpush.xpose.msra.mxu0 %v580
    %691 = vmatmul.f32.gmra.mxu0 %v568
    %v692 = vpop.f32.mrf.mxu0
    %v693 = vadd.f32 %v549, %v692
    %694 = vmatmul.f32.gmra.mxu0 %v571
    %v695 = vpop.f32.mrf.mxu0
    %v696 = vadd.f32 %v554, %v695
    %697 = vmatmul.f32.gmra.mxu0 %v574
    %v698 = vpop.f32.mrf.mxu0
    %v699 = vadd.f32 %v559, %v698
    %700 = vmatmul.f32.gmra.mxu0 %v577
    %v701 = vpop.f32.mrf.mxu0
    %v702 = vadd.f32 %v564, %v701
    %703 = vdwg.mxu0
    %704 = vmatpush.xpose.msra.mxu0 %v673
    %705 = vmatpush.xpose.msra.mxu0 %v670
    %706 = vmatpush.xpose.msra.mxu0 %v667
    %707 = vmatpush.xpose.msra.mxu0 %v664
    %708 = vmatpush.xpose.msra.mxu0 %v661
    %709 = vmatpush.xpose.msra.mxu0 %v658
    %710 = vmatpush.xpose.msra.mxu0 %v655
    %711 = vmatpush.xpose.msra.mxu0 %v652
    %712 = vmatpush.xpose.msra.mxu0 %v649
    %713 = vmatpush.xpose.msra.mxu0 %v646
    %714 = vmatpush.xpose.msra.mxu0 %v643
    %715 = vmatpush.xpose.msra.mxu0 %v640
    %716 = vmatpush.xpose.msra.mxu0 %v637
    %717 = vmatpush.xpose.msra.mxu0 %v634
    %718 = vmatpush.xpose.msra.mxu0 %v631
    %719 = vmatpush.xpose.msra.mxu0 %v628
    %720 = vmatmul.f32.gmra.mxu0 %v568
    %v721 = vpop.f32.mrf.mxu0
    %v722 = vadd.f32 %v549, %v721
    %723 = vmatmul.f32.gmra.mxu0 %v571
    %v724 = vpop.f32.mrf.mxu0
    %v725 = vadd.f32 %v554, %v724
    %726 = vmatmul.f32.gmra.mxu0 %v574
    %v727 = vpop.f32.mrf.mxu0
    %v728 = vadd.f32 %v559, %v727
    %729 = vmatmul.f32.gmra.mxu0 %v577
    %v730 = vpop.f32.mrf.mxu0
    %v731 = vadd.f32 %v564, %v730
    %732 = vdwg.mxu0
    %v733 = vtanh.pop %v693
    %v734 = vtanh.pop %v722
    %v735 = vtanh.pop %v696
    %v736 = vtanh.pop %v725
    %v737 = vtanh.pop %v699
    %v738 = vtanh.pop %v728
    %v739 = vtanh.pop %v702
    %v740 = vtanh.pop %v731
    %741 = vset.pattern.permute.xlu0 1
    %742 = vperm.xlu0 %741, %v24
    %v743 = vpop.permute.xlu0 %742
    %745 = vset.pattern.permute.xlu0 1
    %746 = vperm.xlu0 %745, %v25
    %v747 = vpop.permute.xlu0 %746
    %749 = vset.pattern.permute.xlu0 1
    %750 = vperm.xlu0 %749, %v26
    %v751 = vpop.permute.xlu0 %750
    %753 = vset.pattern.permute.xlu0 1
    %754 = vperm.xlu0 %753, %v27
    %v755 = vpop.permute.xlu0 %754
    %v758 = vsel %vm566, %v32, 0
    %v761 = vsel %vm566, %v33, 0
    %v764 = vsel %vm566, %v34, 0
    %v767 = vsel %vm566, %v35, 0
    %769 = vmatpush.msra.mxu0 0.0
    %770 = vmatpush.msra.mxu0 0.0
    %771 = vmatpush.msra.mxu0 0.0
    %772 = vmatpush.msra.mxu0 0.0
    %773 = vmatpush.msra.mxu0 0.0
    %774 = vmatpush.msra.mxu0 0.0
    %775 = vmatpush.msra.mxu0 0.0
    %776 = vmatpush.msra.mxu0 0.0
    %777 = vmatpush.msra.mxu0 0.0
    %778 = vmatpush.msra.mxu0 0.0
    %779 = vmatpush.msra.mxu0 0.0
    %780 = vmatpush.msra.mxu0 0.0
    %781 = vmatpush.msra.mxu0 %v739
    %782 = vmatpush.msra.mxu0 %v737
    %783 = vmatpush.msra.mxu0 %v735
    %784 = vmatpush.msra.mxu0 %v733
    %785 = vmatmul.f32.gmra.mxu0 %v758
    %v786 = vpop.f32.mrf.mxu0
    %v787 = vadd.f32 %v743, %v786
    %788 = vmatmul.f32.gmra.mxu0 %v761
    %v789 = vpop.f32.mrf.mxu0
    %v790 = vadd.f32 %v747, %v789
    %791 = vmatmul.f32.gmra.mxu0 %v764
    %v792 = vpop.f32.mrf.mxu0
    %v793 = vadd.f32 %v751, %v792
    %794 = vmatmul.f32.gmra.mxu0 %v767
    %v795 = vpop.f32.mrf.mxu0
    %v796 = vadd.f32 %v755, %v795
    %797 = vdwg.mxu0
    %798 = vmatpush.msra.mxu0 0.0
    %799 = vmatpush.msra.mxu0 0.0
    %800 = vmatpush.msra.mxu0 0.0
    %801 = vmatpush.msra.mxu0 0.0
    %802 = vmatpush.msra.mxu0 0.0
    %803 = vmatpush.msra.mxu0 0.0
    %804 = vmatpush.msra.mxu0 0.0
    %805 = vmatpush.msra.mxu0 0.0
    %806 = vmatpush.msra.mxu0 0.0
    %807 = vmatpush.msra.mxu0 0.0
    %808 = vmatpush.msra.mxu0 0.0
    %809 = vmatpush.msra.mxu0 0.0
    %810 = vmatpush.msra.mxu0 %v740
    %811 = vmatpush.msra.mxu0 %v738
    %812 = vmatpush.msra.mxu0 %v736
    %813 = vmatpush.msra.mxu0 %v734
    %814 = vmatmul.f32.gmra.mxu0 %v758
    %v815 = vpop.f32.mrf.mxu0
    %v816 = vadd.f32 %v743, %v815
    %817 = vmatmul.f32.gmra.mxu0 %v761
    %v818 = vpop.f32.mrf.mxu0
    %v819 = vadd.f32 %v747, %v818
    %820 = vmatmul.f32.gmra.mxu0 %v764
    %v821 = vpop.f32.mrf.mxu0
    %v822 = vadd.f32 %v751, %v821
    %823 = vmatmul.f32.gmra.mxu0 %v767
    %v824 = vpop.f32.mrf.mxu0
    %v825 = vadd.f32 %v755, %v824
    %826 = vdwg.mxu0
    %v827 = vtanh.pop %v787
    %v828 = vtanh.pop %v816
    %v829 = vtanh.pop %v790
    %v830 = vtanh.pop %v819
    %v831 = vtanh.pop %v793
    %v832 = vtanh.pop %v822
    %v833 = vtanh.pop %v796
    %v834 = vtanh.pop %v825
    %835 = vset.pattern.permute.xlu0 2
    %836 = vperm.xlu0 %835, %v24
    %v837 = vpop.permute.xlu0 %836
    %v840 = vrot.slane %v23, 3
    %v841 = vsel %vm566, %v840, 0
    %843 = vmatpush.msra.mxu0 0.0
    %844 = vmatpush.msra.mxu0 0.0
    %845 = vmatpush.msra.mxu0 0.0
    %846 = vmatpush.msra.mxu0 0.0
    %847 = vmatpush.msra.mxu0 0.0
    %848 = vmatpush.msra.mxu0 0.0
    %849 = vmatpush.msra.mxu0 0.0
    %850 = vmatpush.msra.mxu0 0.0
    %851 = vmatpush.msra.mxu0 0.0
    %852 = vmatpush.msra.mxu0 0.0
    %853 = vmatpush.msra.mxu0 0.0
    %854 = vmatpush.msra.mxu0 0.0
    %855 = vmatpush.msra.mxu0 %v833
    %856 = vmatpush.msra.mxu0 %v831
    %857 = vmatpush.msra.mxu0 %v829
    %858 = vmatpush.msra.mxu0 %v827
    %859 = vmatmul.f32.gmra.mxu0 %v841
    %v860 = vpop.f32.mrf.mxu0
    %v861 = vadd.f32 %v837, %v860
    %862 = vdwg.mxu0
    %863 = vmatpush.msra.mxu0 0.0
    %864 = vmatpush.msra.mxu0 0.0
    %865 = vmatpush.msra.mxu0 0.0
    %866 = vmatpush.msra.mxu0 0.0
    %867 = vmatpush.msra.mxu0 0.0
    %868 = vmatpush.msra.mxu0 0.0
    %869 = vmatpush.msra.mxu0 0.0
    %870 = vmatpush.msra.mxu0 0.0
    %871 = vmatpush.msra.mxu0 0.0
    %872 = vmatpush.msra.mxu0 0.0
    %873 = vmatpush.msra.mxu0 0.0
    %874 = vmatpush.msra.mxu0 0.0
    %875 = vmatpush.msra.mxu0 %v834
    %876 = vmatpush.msra.mxu0 %v832
    %877 = vmatpush.msra.mxu0 %v830
    %878 = vmatpush.msra.mxu0 %v828
    %879 = vmatmul.f32.gmra.mxu0 %v841
    %v880 = vpop.f32.mrf.mxu0
    %v881 = vadd.f32 %v837, %v880
    %882 = vdwg.mxu0
    %v885 = vrot.slane %v881, 7
    %vm886 = vcmask 1040384
    %v887 = vsel %vm886, %v861, %v885
    %v889 = vlaneseq
    %vm890 = vcmp.ge.s32.totalorder %v889, 0
    %vm891 = vcmp.lt.s32.totalorder %v889, 256
    %vm892 = vmand %vm890, %vm891
    %893 = vst.msk [vmem:[#allocation2] sm:$0x3] %vm892, %v887
    %s894 = scalar_lea.vmem %s0, 256
    %v895 = vld [vmem:[%s894] sm:$0xff]
    %v896 = vld [vmem:[%s894 + $0x8] sm:$0xff]
    %v897 = vld [vmem:[%s894 + $0x10] sm:$0xff]
    %v898 = vld [vmem:[%s894 + $0x18] sm:$0xff]
    %v899 = vld [vmem:[%s894 + $0x20] sm:$0xff]
    %v900 = vld [vmem:[%s894 + $0x28] sm:$0xff]
    %v901 = vld [vmem:[%s894 + $0x30] sm:$0xff]
    %v902 = vld [vmem:[%s894 + $0x38] sm:$0xff]
    %v903 = vld [vmem:[%s894 + $0x40] sm:$0xff]
    %v904 = vld [vmem:[%s894 + $0x48] sm:$0xff]
    %v905 = vld [vmem:[%s894 + $0x50] sm:$0xff]
    %v906 = vld [vmem:[%s894 + $0x58] sm:$0xff]
    %v907 = vld [vmem:[%s894 + $0x60] sm:$0xff]
    %v908 = vld [vmem:[%s894 + $0x68] sm:$0xff]
    %v909 = vld [vmem:[%s894 + $0x70] sm:$0xff]
    %v910 = vld [vmem:[%s894 + $0x78] sm:$0xff]
    %v911 = vld [vmem:[%s894 + $0x80] sm:$0xff]
    %v912 = vld [vmem:[%s894 + $0x88] sm:$0xff]
    %v913 = vld [vmem:[%s894 + $0x90] sm:$0xff]
    %v914 = vld [vmem:[%s894 + $0x98] sm:$0xff]
    %v915 = vld [vmem:[%s894 + $0xa0] sm:$0xff]
    %v916 = vld [vmem:[%s894 + $0xa8] sm:$0xff]
    %v917 = vld [vmem:[%s894 + $0xb0] sm:$0xff]
    %v918 = vld [vmem:[%s894 + $0xb8] sm:$0xff]
    %v919 = vld [vmem:[%s894 + $0xc0] sm:$0xff]
    %v920 = vld [vmem:[%s894 + $0xc8] sm:$0xff]
    %v921 = vld [vmem:[%s894 + $0xd0] sm:$0xff]
    %v922 = vld [vmem:[%s894 + $0xd8] sm:$0xff]
    %v923 = vld [vmem:[%s894 + $0xe0] sm:$0xff]
    %v924 = vld [vmem:[%s894 + $0xe8] sm:$0xff]
    %v925 = vld [vmem:[%s894 + $0xf0] sm:$0xff]
    %v926 = vld [vmem:[%s894 + $0xf8] sm:$0xff]
    %928 = vset.pattern.permute.xlu0 0
    %929 = vperm.xlu0 %928, %v895
    %v930 = vpop.permute.xlu0 %929
    %933 = vset.pattern.permute.xlu0 0
    %934 = vperm.xlu0 %933, %v896
    %v935 = vpop.permute.xlu0 %934
    %938 = vset.pattern.permute.xlu0 0
    %939 = vperm.xlu0 %938, %v897
    %v940 = vpop.permute.xlu0 %939
    %943 = vset.pattern.permute.xlu0 0
    %944 = vperm.xlu0 %943, %v898
    %v945 = vpop.permute.xlu0 %944
    %948 = vset.pattern.permute.xlu0 0
    %949 = vperm.xlu0 %948, %v899
    %v950 = vpop.permute.xlu0 %949
    %953 = vset.pattern.permute.xlu0 0
    %954 = vperm.xlu0 %953, %v900
    %v955 = vpop.permute.xlu0 %954
    %958 = vset.pattern.permute.xlu0 0
    %959 = vperm.xlu0 %958, %v901
    %v960 = vpop.permute.xlu0 %959
    %963 = vset.pattern.permute.xlu0 0
    %964 = vperm.xlu0 %963, %v902
    %v965 = vpop.permute.xlu0 %964
    %968 = vset.pattern.permute.xlu0 0
    %969 = vperm.xlu0 %968, %v903
    %v970 = vpop.permute.xlu0 %969
    %973 = vset.pattern.permute.xlu0 0
    %974 = vperm.xlu0 %973, %v904
    %v975 = vpop.permute.xlu0 %974
    %978 = vset.pattern.permute.xlu0 0
    %979 = vperm.xlu0 %978, %v905
    %v980 = vpop.permute.xlu0 %979
    %983 = vset.pattern.permute.xlu0 0
    %984 = vperm.xlu0 %983, %v906
    %v985 = vpop.permute.xlu0 %984
    %988 = vset.pattern.permute.xlu0 0
    %989 = vperm.xlu0 %988, %v907
    %v990 = vpop.permute.xlu0 %989
    %993 = vset.pattern.permute.xlu0 0
    %994 = vperm.xlu0 %993, %v908
    %v995 = vpop.permute.xlu0 %994
    %998 = vset.pattern.permute.xlu0 0
    %999 = vperm.xlu0 %998, %v909
    %v1000 = vpop.permute.xlu0 %999
    %1003 = vset.pattern.permute.xlu0 0
    %1004 = vperm.xlu0 %1003, %v910
    %v1005 = vpop.permute.xlu0 %1004
    %1008 = vset.pattern.permute.xlu0 0
    %1009 = vperm.xlu0 %1008, %v911
    %v1010 = vpop.permute.xlu0 %1009
    %1013 = vset.pattern.permute.xlu0 0
    %1014 = vperm.xlu0 %1013, %v912
    %v1015 = vpop.permute.xlu0 %1014
    %1018 = vset.pattern.permute.xlu0 0
    %1019 = vperm.xlu0 %1018, %v913
    %v1020 = vpop.permute.xlu0 %1019
    %1023 = vset.pattern.permute.xlu0 0
    %1024 = vperm.xlu0 %1023, %v914
    %v1025 = vpop.permute.xlu0 %1024
    %1028 = vset.pattern.permute.xlu0 0
    %1029 = vperm.xlu0 %1028, %v915
    %v1030 = vpop.permute.xlu0 %1029
    %1033 = vset.pattern.permute.xlu0 0
    %1034 = vperm.xlu0 %1033, %v916
    %v1035 = vpop.permute.xlu0 %1034
    %1038 = vset.pattern.permute.xlu0 0
    %1039 = vperm.xlu0 %1038, %v917
    %v1040 = vpop.permute.xlu0 %1039
    %1043 = vset.pattern.permute.xlu0 0
    %1044 = vperm.xlu0 %1043, %v918
    %v1045 = vpop.permute.xlu0 %1044
    %1048 = vset.pattern.permute.xlu0 0
    %1049 = vperm.xlu0 %1048, %v919
    %v1050 = vpop.permute.xlu0 %1049
    %1053 = vset.pattern.permute.xlu0 0
    %1054 = vperm.xlu0 %1053, %v920
    %v1055 = vpop.permute.xlu0 %1054
    %1058 = vset.pattern.permute.xlu0 0
    %1059 = vperm.xlu0 %1058, %v921
    %v1060 = vpop.permute.xlu0 %1059
    %1063 = vset.pattern.permute.xlu0 0
    %1064 = vperm.xlu0 %1063, %v922
    %v1065 = vpop.permute.xlu0 %1064
    %1068 = vset.pattern.permute.xlu0 0
    %1069 = vperm.xlu0 %1068, %v923
    %v1070 = vpop.permute.xlu0 %1069
    %1073 = vset.pattern.permute.xlu0 0
    %1074 = vperm.xlu0 %1073, %v924
    %v1075 = vpop.permute.xlu0 %1074
    %1078 = vset.pattern.permute.xlu0 0
    %1079 = vperm.xlu0 %1078, %v925
    %v1080 = vpop.permute.xlu0 %1079
    %1083 = vset.pattern.permute.xlu0 0
    %1084 = vperm.xlu0 %1083, %v926
    %v1085 = vpop.permute.xlu0 %1084
    %v1087 = vmul.f32 %v930, %v255
    %v1088 = vmul.f32 %v935, %v255
    %v1089 = vmul.f32 %v940, %v255
    %v1090 = vmul.f32 %v945, %v255
    %v1091 = vmul.f32 %v950, %v255
    %v1092 = vmul.f32 %v955, %v255
    %v1093 = vmul.f32 %v960, %v255
    %v1094 = vmul.f32 %v965, %v255
    %v1095 = vmul.f32 %v970, %v255
    %v1096 = vmul.f32 %v975, %v255
    %v1097 = vmul.f32 %v980, %v255
    %v1098 = vmul.f32 %v985, %v255
    %v1099 = vmul.f32 %v990, %v255
    %v1100 = vmul.f32 %v995, %v255
    %v1101 = vmul.f32 %v1000, %v255
    %v1102 = vmul.f32 %v1005, %v255
    %v1103 = vmul.f32 %v1010, %v255
    %v1104 = vmul.f32 %v1015, %v255
    %v1105 = vmul.f32 %v1020, %v255
    %v1106 = vmul.f32 %v1025, %v255
    %v1107 = vmul.f32 %v1030, %v255
    %v1108 = vmul.f32 %v1035, %v255
    %v1109 = vmul.f32 %v1040, %v255
    %v1110 = vmul.f32 %v1045, %v255
    %v1111 = vmul.f32 %v1050, %v255
    %v1112 = vmul.f32 %v1055, %v255
    %v1113 = vmul.f32 %v1060, %v255
    %v1114 = vmul.f32 %v1065, %v255
    %v1115 = vmul.f32 %v1070, %v255
    %v1116 = vmul.f32 %v1075, %v255
    %v1117 = vmul.f32 %v1080, %v255
    %v1118 = vmul.f32 %v1085, %v255
    %1119 = vset.pattern.permute.xlu0 1
    %1120 = vperm.xlu0 %1119, %v895
    %v1121 = vpop.permute.xlu0 %1120
    %1123 = vset.pattern.permute.xlu0 1
    %1124 = vperm.xlu0 %1123, %v896
    %v1125 = vpop.permute.xlu0 %1124
    %1127 = vset.pattern.permute.xlu0 1
    %1128 = vperm.xlu0 %1127, %v897
    %v1129 = vpop.permute.xlu0 %1128
    %1131 = vset.pattern.permute.xlu0 1
    %1132 = vperm.xlu0 %1131, %v898
    %v1133 = vpop.permute.xlu0 %1132
    %1135 = vset.pattern.permute.xlu0 1
    %1136 = vperm.xlu0 %1135, %v899
    %v1137 = vpop.permute.xlu0 %1136
    %1139 = vset.pattern.permute.xlu0 1
    %1140 = vperm.xlu0 %1139, %v900
    %v1141 = vpop.permute.xlu0 %1140
    %1143 = vset.pattern.permute.xlu0 1
    %1144 = vperm.xlu0 %1143, %v901
    %v1145 = vpop.permute.xlu0 %1144
    %1147 = vset.pattern.permute.xlu0 1
    %1148 = vperm.xlu0 %1147, %v902
    %v1149 = vpop.permute.xlu0 %1148
    %1151 = vset.pattern.permute.xlu0 1
    %1152 = vperm.xlu0 %1151, %v903
    %v1153 = vpop.permute.xlu0 %1152
    %1155 = vset.pattern.permute.xlu0 1
    %1156 = vperm.xlu0 %1155, %v904
    %v1157 = vpop.permute.xlu0 %1156
    %1159 = vset.pattern.permute.xlu0 1
    %1160 = vperm.xlu0 %1159, %v905
    %v1161 = vpop.permute.xlu0 %1160
    %1163 = vset.pattern.permute.xlu0 1
    %1164 = vperm.xlu0 %1163, %v906
    %v1165 = vpop.permute.xlu0 %1164
    %1167 = vset.pattern.permute.xlu0 1
    %1168 = vperm.xlu0 %1167, %v907
    %v1169 = vpop.permute.xlu0 %1168
    %1171 = vset.pattern.permute.xlu0 1
    %1172 = vperm.xlu0 %1171, %v908
    %v1173 = vpop.permute.xlu0 %1172
    %1175 = vset.pattern.permute.xlu0 1
    %1176 = vperm.xlu0 %1175, %v909
    %v1177 = vpop.permute.xlu0 %1176
    %1179 = vset.pattern.permute.xlu0 1
    %1180 = vperm.xlu0 %1179, %v910
    %v1181 = vpop.permute.xlu0 %1180
    %1183 = vset.pattern.permute.xlu0 1
    %1184 = vperm.xlu0 %1183, %v911
    %v1185 = vpop.permute.xlu0 %1184
    %1187 = vset.pattern.permute.xlu0 1
    %1188 = vperm.xlu0 %1187, %v912
    %v1189 = vpop.permute.xlu0 %1188
    %1191 = vset.pattern.permute.xlu0 1
    %1192 = vperm.xlu0 %1191, %v913
    %v1193 = vpop.permute.xlu0 %1192
    %1195 = vset.pattern.permute.xlu0 1
    %1196 = vperm.xlu0 %1195, %v914
    %v1197 = vpop.permute.xlu0 %1196
    %1199 = vset.pattern.permute.xlu0 1
    %1200 = vperm.xlu0 %1199, %v915
    %v1201 = vpop.permute.xlu0 %1200
    %1203 = vset.pattern.permute.xlu0 1
    %1204 = vperm.xlu0 %1203, %v916
    %v1205 = vpop.permute.xlu0 %1204
    %1207 = vset.pattern.permute.xlu0 1
    %1208 = vperm.xlu0 %1207, %v917
    %v1209 = vpop.permute.xlu0 %1208
    %1211 = vset.pattern.permute.xlu0 1
    %1212 = vperm.xlu0 %1211, %v918
    %v1213 = vpop.permute.xlu0 %1212
    %1215 = vset.pattern.permute.xlu0 1
    %1216 = vperm.xlu0 %1215, %v919
    %v1217 = vpop.permute.xlu0 %1216
    %1219 = vset.pattern.permute.xlu0 1
    %1220 = vperm.xlu0 %1219, %v920
    %v1221 = vpop.permute.xlu0 %1220
    %1223 = vset.pattern.permute.xlu0 1
    %1224 = vperm.xlu0 %1223, %v921
    %v1225 = vpop.permute.xlu0 %1224
    %1227 = vset.pattern.permute.xlu0 1
    %1228 = vperm.xlu0 %1227, %v922
    %v1229 = vpop.permute.xlu0 %1228
    %1231 = vset.pattern.permute.xlu0 1
    %1232 = vperm.xlu0 %1231, %v923
    %v1233 = vpop.permute.xlu0 %1232
    %1235 = vset.pattern.permute.xlu0 1
    %1236 = vperm.xlu0 %1235, %v924
    %v1237 = vpop.permute.xlu0 %1236
    %1239 = vset.pattern.permute.xlu0 1
    %1240 = vperm.xlu0 %1239, %v925
    %v1241 = vpop.permute.xlu0 %1240
    %1243 = vset.pattern.permute.xlu0 1
    %1244 = vperm.xlu0 %1243, %v926
    %v1245 = vpop.permute.xlu0 %1244
    %v1247 = vmul.f32 %v1121, %v416
    %v1248 = vmul.f32 %v1125, %v416
    %v1249 = vmul.f32 %v1129, %v416
    %v1250 = vmul.f32 %v1133, %v416
    %v1251 = vmul.f32 %v1137, %v416
    %v1252 = vmul.f32 %v1141, %v416
    %v1253 = vmul.f32 %v1145, %v416
    %v1254 = vmul.f32 %v1149, %v416
    %v1255 = vmul.f32 %v1153, %v416
    %v1256 = vmul.f32 %v1157, %v416
    %v1257 = vmul.f32 %v1161, %v416
    %v1258 = vmul.f32 %v1165, %v416
    %v1259 = vmul.f32 %v1169, %v416
    %v1260 = vmul.f32 %v1173, %v416
    %v1261 = vmul.f32 %v1177, %v416
    %v1262 = vmul.f32 %v1181, %v416
    %v1263 = vmul.f32 %v1185, %v416
    %v1264 = vmul.f32 %v1189, %v416
    %v1265 = vmul.f32 %v1193, %v416
    %v1266 = vmul.f32 %v1197, %v416
    %v1267 = vmul.f32 %v1201, %v416
    %v1268 = vmul.f32 %v1205, %v416
    %v1269 = vmul.f32 %v1209, %v416
    %v1270 = vmul.f32 %v1213, %v416
    %v1271 = vmul.f32 %v1217, %v416
    %v1272 = vmul.f32 %v1221, %v416
    %v1273 = vmul.f32 %v1225, %v416
    %v1274 = vmul.f32 %v1229, %v416
    %v1275 = vmul.f32 %v1233, %v416
    %v1276 = vmul.f32 %v1237, %v416
    %v1277 = vmul.f32 %v1241, %v416
    %v1278 = vmul.f32 %v1245, %v416
    %v1279 = vadd.f32 %v1087, %v1247
    %v1280 = vadd.f32 %v1088, %v1248
    %v1281 = vadd.f32 %v1089, %v1249
    %v1282 = vadd.f32 %v1090, %v1250
    %v1283 = vadd.f32 %v1091, %v1251
    %v1284 = vadd.f32 %v1092, %v1252
    %v1285 = vadd.f32 %v1093, %v1253
    %v1286 = vadd.f32 %v1094, %v1254
    %v1287 = vadd.f32 %v1095, %v1255
    %v1288 = vadd.f32 %v1096, %v1256
    %v1289 = vadd.f32 %v1097, %v1257
    %v1290 = vadd.f32 %v1098, %v1258
    %v1291 = vadd.f32 %v1099, %v1259
    %v1292 = vadd.f32 %v1100, %v1260
    %v1293 = vadd.f32 %v1101, %v1261
    %v1294 = vadd.f32 %v1102, %v1262
    %v1295 = vadd.f32 %v1103, %v1263
    %v1296 = vadd.f32 %v1104, %v1264
    %v1297 = vadd.f32 %v1105, %v1265
    %v1298 = vadd.f32 %v1106, %v1266
    %v1299 = vadd.f32 %v1107, %v1267
    %v1300 = vadd.f32 %v1108, %v1268
    %v1301 = vadd.f32 %v1109, %v1269
    %v1302 = vadd.f32 %v1110, %v1270
    %v1303 = vadd.f32 %v1111, %v1271
    %v1304 = vadd.f32 %v1112, %v1272
    %v1305 = vadd.f32 %v1113, %v1273
    %v1306 = vadd.f32 %v1114, %v1274
    %v1307 = vadd.f32 %v1115, %v1275
    %v1308 = vadd.f32 %v1116, %v1276
    %v1309 = vadd.f32 %v1117, %v1277
    %v1310 = vadd.f32 %v1118, %v1278
    %v1311 = vperm.slane %v62, 1
    %v1312 = vadd.f32 %v1279, %v1311
    %v1313 = vadd.f32 %v1280, %v1311
    %v1314 = vadd.f32 %v1281, %v1311
    %v1315 = vadd.f32 %v1282, %v1311
    %v1316 = vadd.f32 %v1283, %v1311
    %v1317 = vadd.f32 %v1284, %v1311
    %v1318 = vadd.f32 %v1285, %v1311
    %v1319 = vadd.f32 %v1286, %v1311
    %v1320 = vadd.f32 %v1287, %v1311
    %v1321 = vadd.f32 %v1288, %v1311
    %v1322 = vadd.f32 %v1289, %v1311
    %v1323 = vadd.f32 %v1290, %v1311
    %v1324 = vadd.f32 %v1291, %v1311
    %v1325 = vadd.f32 %v1292, %v1311
    %v1326 = vadd.f32 %v1293, %v1311
    %v1327 = vadd.f32 %v1294, %v1311
    %v1328 = vadd.f32 %v1295, %v1311
    %v1329 = vadd.f32 %v1296, %v1311
    %v1330 = vadd.f32 %v1297, %v1311
    %v1331 = vadd.f32 %v1298, %v1311
    %v1332 = vadd.f32 %v1299, %v1311
    %v1333 = vadd.f32 %v1300, %v1311
    %v1334 = vadd.f32 %v1301, %v1311
    %v1335 = vadd.f32 %v1302, %v1311
    %v1336 = vadd.f32 %v1303, %v1311
    %v1337 = vadd.f32 %v1304, %v1311
    %v1338 = vadd.f32 %v1305, %v1311
    %v1339 = vadd.f32 %v1306, %v1311
    %v1340 = vadd.f32 %v1307, %v1311
    %v1341 = vadd.f32 %v1308, %v1311
    %v1342 = vadd.f32 %v1309, %v1311
    %v1343 = vadd.f32 %v1310, %v1311
    %v1344 = vtanh.pop %v1312
    %v1345 = vtanh.pop %v1313
    %v1346 = vtanh.pop %v1314
    %v1347 = vtanh.pop %v1315
    %v1348 = vtanh.pop %v1316
    %v1349 = vtanh.pop %v1317
    %v1350 = vtanh.pop %v1318
    %v1351 = vtanh.pop %v1319
    %v1352 = vtanh.pop %v1320
    %v1353 = vtanh.pop %v1321
    %v1354 = vtanh.pop %v1322
    %v1355 = vtanh.pop %v1323
    %v1356 = vtanh.pop %v1324
    %v1357 = vtanh.pop %v1325
    %v1358 = vtanh.pop %v1326
    %v1359 = vtanh.pop %v1327
    %v1360 = vtanh.pop %v1328
    %v1361 = vtanh.pop %v1329
    %v1362 = vtanh.pop %v1330
    %v1363 = vtanh.pop %v1331
    %v1364 = vtanh.pop %v1332
    %v1365 = vtanh.pop %v1333
    %v1366 = vtanh.pop %v1334
    %v1367 = vtanh.pop %v1335
    %v1368 = vtanh.pop %v1336
    %v1369 = vtanh.pop %v1337
    %v1370 = vtanh.pop %v1338
    %v1371 = vtanh.pop %v1339
    %v1372 = vtanh.pop %v1340
    %v1373 = vtanh.pop %v1341
    %v1374 = vtanh.pop %v1342
    %v1375 = vtanh.pop %v1343
    %v1377 = vsel %vm566, %v1344, 0
    %v1380 = vsel %vm566, %v1345, 0
    %v1383 = vsel %vm566, %v1346, 0
    %v1386 = vsel %vm566, %v1347, 0
    %v1389 = vsel %vm566, %v1348, 0
    %v1392 = vsel %vm566, %v1349, 0
    %v1395 = vsel %vm566, %v1350, 0
    %v1398 = vsel %vm566, %v1351, 0
    %v1401 = vsel %vm566, %v1352, 0
    %v1404 = vsel %vm566, %v1353, 0
    %v1407 = vsel %vm566, %v1354, 0
    %v1410 = vsel %vm566, %v1355, 0
    %v1413 = vsel %vm566, %v1356, 0
    %v1416 = vsel %vm566, %v1357, 0
    %v1419 = vsel %vm566, %v1358, 0
    %v1422 = vsel %vm566, %v1359, 0
    %v1425 = vsel %vm566, %v1360, 0
    %v1428 = vsel %vm566, %v1361, 0
    %v1431 = vsel %vm566, %v1362, 0
    %v1434 = vsel %vm566, %v1363, 0
    %v1437 = vsel %vm566, %v1364, 0
    %v1440 = vsel %vm566, %v1365, 0
    %v1443 = vsel %vm566, %v1366, 0
    %v1446 = vsel %vm566, %v1367, 0
    %v1449 = vsel %vm566, %v1368, 0
    %v1452 = vsel %vm566, %v1369, 0
    %v1455 = vsel %vm566, %v1370, 0
    %v1458 = vsel %vm566, %v1371, 0
    %v1461 = vsel %vm566, %v1372, 0
    %v1464 = vsel %vm566, %v1373, 0
    %v1467 = vsel %vm566, %v1374, 0
    %v1470 = vsel %vm566, %v1375, 0
    %1472 = vmatpush.xpose.msra.mxu0 %v1422
    %1473 = vmatpush.xpose.msra.mxu0 %v1419
    %1474 = vmatpush.xpose.msra.mxu0 %v1416
    %1475 = vmatpush.xpose.msra.mxu0 %v1413
    %1476 = vmatpush.xpose.msra.mxu0 %v1410
    %1477 = vmatpush.xpose.msra.mxu0 %v1407
    %1478 = vmatpush.xpose.msra.mxu0 %v1404
    %1479 = vmatpush.xpose.msra.mxu0 %v1401
    %1480 = vmatpush.xpose.msra.mxu0 %v1398
    %1481 = vmatpush.xpose.msra.mxu0 %v1395
    %1482 = vmatpush.xpose.msra.mxu0 %v1392
    %1483 = vmatpush.xpose.msra.mxu0 %v1389
    %1484 = vmatpush.xpose.msra.mxu0 %v1386
    %1485 = vmatpush.xpose.msra.mxu0 %v1383
    %1486 = vmatpush.xpose.msra.mxu0 %v1380
    %1487 = vmatpush.xpose.msra.mxu0 %v1377
    %1488 = vmatmul.f32.gmra.mxu0 %v568
    %v1489 = vpop.f32.mrf.mxu0
    %v1490 = vadd.f32 %v549, %v1489
    %1491 = vmatmul.f32.gmra.mxu0 %v571
    %v1492 = vpop.f32.mrf.mxu0
    %v1493 = vadd.f32 %v554, %v1492
    %1494 = vmatmul.f32.gmra.mxu0 %v574
    %v1495 = vpop.f32.mrf.mxu0
    %v1496 = vadd.f32 %v559, %v1495
    %1497 = vmatmul.f32.gmra.mxu0 %v577
    %v1498 = vpop.f32.mrf.mxu0
    %v1499 = vadd.f32 %v564, %v1498
    %1500 = vdwg.mxu0
    %1501 = vmatpush.xpose.msra.mxu0 %v1470
    %1502 = vmatpush.xpose.msra.mxu0 %v1467
    %1503 = vmatpush.xpose.msra.mxu0 %v1464
    %1504 = vmatpush.xpose.msra.mxu0 %v1461
    %1505 = vmatpush.xpose.msra.mxu0 %v1458
    %1506 = vmatpush.xpose.msra.mxu0 %v1455
    %1507 = vmatpush.xpose.msra.mxu0 %v1452
    %1508 = vmatpush.xpose.msra.mxu0 %v1449
    %1509 = vmatpush.xpose.msra.mxu0 %v1446
    %1510 = vmatpush.xpose.msra.mxu0 %v1443
    %1511 = vmatpush.xpose.msra.mxu0 %v1440
    %1512 = vmatpush.xpose.msra.mxu0 %v1437
    %1513 = vmatpush.xpose.msra.mxu0 %v1434
    %1514 = vmatpush.xpose.msra.mxu0 %v1431
    %1515 = vmatpush.xpose.msra.mxu0 %v1428
    %1516 = vmatpush.xpose.msra.mxu0 %v1425
    %1517 = vmatmul.f32.gmra.mxu0 %v568
    %v1518 = vpop.f32.mrf.mxu0
    %v1519 = vadd.f32 %v549, %v1518
    %1520 = vmatmul.f32.gmra.mxu0 %v571
    %v1521 = vpop.f32.mrf.mxu0
    %v1522 = vadd.f32 %v554, %v1521
    %1523 = vmatmul.f32.gmra.mxu0 %v574
    %v1524 = vpop.f32.mrf.mxu0
    %v1525 = vadd.f32 %v559, %v1524
    %1526 = vmatmul.f32.gmra.mxu0 %v577
    %v1527 = vpop.f32.mrf.mxu0
    %v1528 = vadd.f32 %v564, %v1527
    %1529 = vdwg.mxu0
    %v1530 = vtanh.pop %v1490
    %v1531 = vtanh.pop %v1519
    %v1532 = vtanh.pop %v1493
    %v1533 = vtanh.pop %v1522
    %v1534 = vtanh.pop %v1496
    %v1535 = vtanh.pop %v1525
    %v1536 = vtanh.pop %v1499
    %v1537 = vtanh.pop %v1528
    %1538 = vmatpush.msra.mxu0 0.0
    %1539 = vmatpush.msra.mxu0 0.0
    %1540 = vmatpush.msra.mxu0 0.0
    %1541 = vmatpush.msra.mxu0 0.0
    %1542 = vmatpush.msra.mxu0 0.0
    %1543 = vmatpush.msra.mxu0 0.0
    %1544 = vmatpush.msra.mxu0 0.0
    %1545 = vmatpush.msra.mxu0 0.0
    %1546 = vmatpush.msra.mxu0 0.0
    %1547 = vmatpush.msra.mxu0 0.0
    %1548 = vmatpush.msra.mxu0 0.0
    %1549 = vmatpush.msra.mxu0 0.0
    %1550 = vmatpush.msra.mxu0 %v1536
    %1551 = vmatpush.msra.mxu0 %v1534
    %1552 = vmatpush.msra.mxu0 %v1532
    %1553 = vmatpush.msra.mxu0 %v1530
    %1554 = vmatmul.f32.gmra.mxu0 %v758
    %v1555 = vpop.f32.mrf.mxu0
    %v1556 = vadd.f32 %v743, %v1555
    %1557 = vmatmul.f32.gmra.mxu0 %v761
    %v1558 = vpop.f32.mrf.mxu0
    %v1559 = vadd.f32 %v747, %v1558
    %1560 = vmatmul.f32.gmra.mxu0 %v764
    %v1561 = vpop.f32.mrf.mxu0
    %v1562 = vadd.f32 %v751, %v1561
    %1563 = vmatmul.f32.gmra.mxu0 %v767
    %v1564 = vpop.f32.mrf.mxu0
    %v1565 = vadd.f32 %v755, %v1564
    %1566 = vdwg.mxu0
    %1567 = vmatpush.msra.mxu0 0.0
    %1568 = vmatpush.msra.mxu0 0.0
    %1569 = vmatpush.msra.mxu0 0.0
    %1570 = vmatpush.msra.mxu0 0.0
    %1571 = vmatpush.msra.mxu0 0.0
    %1572 = vmatpush.msra.mxu0 0.0
    %1573 = vmatpush.msra.mxu0 0.0
    %1574 = vmatpush.msra.mxu0 0.0
    %1575 = vmatpush.msra.mxu0 0.0
    %1576 = vmatpush.msra.mxu0 0.0
    %1577 = vmatpush.msra.mxu0 0.0
    %1578 = vmatpush.msra.mxu0 0.0
    %1579 = vmatpush.msra.mxu0 %v1537
    %1580 = vmatpush.msra.mxu0 %v1535
    %1581 = vmatpush.msra.mxu0 %v1533
    %1582 = vmatpush.msra.mxu0 %v1531
    %1583 = vmatmul.f32.gmra.mxu0 %v758
    %v1584 = vpop.f32.mrf.mxu0
    %v1585 = vadd.f32 %v743, %v1584
    %1586 = vmatmul.f32.gmra.mxu0 %v761
    %v1587 = vpop.f32.mrf.mxu0
    %v1588 = vadd.f32 %v747, %v1587
    %1589 = vmatmul.f32.gmra.mxu0 %v764
    %v1590 = vpop.f32.mrf.mxu0
    %v1591 = vadd.f32 %v751, %v1590
    %1592 = vmatmul.f32.gmra.mxu0 %v767
    %v1593 = vpop.f32.mrf.mxu0
    %v1594 = vadd.f32 %v755, %v1593
    %1595 = vdwg.mxu0
    %v1596 = vtanh.pop %v1556
    %v1597 = vtanh.pop %v1585
    %v1598 = vtanh.pop %v1559
    %v1599 = vtanh.pop %v1588
    %v1600 = vtanh.pop %v1562
    %v1601 = vtanh.pop %v1591
    %v1602 = vtanh.pop %v1565
    %v1603 = vtanh.pop %v1594
    %1604 = vmatpush.msra.mxu0 0.0
    %1605 = vmatpush.msra.mxu0 0.0
    %1606 = vmatpush.msra.mxu0 0.0
    %1607 = vmatpush.msra.mxu0 0.0
    %1608 = vmatpush.msra.mxu0 0.0
    %1609 = vmatpush.msra.mxu0 0.0
    %1610 = vmatpush.msra.mxu0 0.0
    %1611 = vmatpush.msra.mxu0 0.0
    %1612 = vmatpush.msra.mxu0 0.0
    %1613 = vmatpush.msra.mxu0 0.0
    %1614 = vmatpush.msra.mxu0 0.0
    %1615 = vmatpush.msra.mxu0 0.0
    %1616 = vmatpush.msra.mxu0 %v1602
    %1617 = vmatpush.msra.mxu0 %v1600
    %1618 = vmatpush.msra.mxu0 %v1598
    %1619 = vmatpush.msra.mxu0 %v1596
    %1620 = vmatmul.f32.gmra.mxu0 %v841
    %v1621 = vpop.f32.mrf.mxu0
    %v1622 = vadd.f32 %v837, %v1621
    %1623 = vdwg.mxu0
    %1624 = vmatpush.msra.mxu0 0.0
    %1625 = vmatpush.msra.mxu0 0.0
    %1626 = vmatpush.msra.mxu0 0.0
    %1627 = vmatpush.msra.mxu0 0.0
    %1628 = vmatpush.msra.mxu0 0.0
    %1629 = vmatpush.msra.mxu0 0.0
    %1630 = vmatpush.msra.mxu0 0.0
    %1631 = vmatpush.msra.mxu0 0.0
    %1632 = vmatpush.msra.mxu0 0.0
    %1633 = vmatpush.msra.mxu0 0.0
    %1634 = vmatpush.msra.mxu0 0.0
    %1635 = vmatpush.msra.mxu0 0.0
    %1636 = vmatpush.msra.mxu0 %v1603
    %1637 = vmatpush.msra.mxu0 %v1601
    %1638 = vmatpush.msra.mxu0 %v1599
    %1639 = vmatpush.msra.mxu0 %v1597
    %1640 = vmatmul.f32.gmra.mxu0 %v841
    %v1641 = vpop.f32.mrf.mxu0
    %v1642 = vadd.f32 %v837, %v1641
    %1643 = vdwg.mxu0
    %v1646 = vrot.slane %v1642, 7
    %v1647 = vsel %vm886, %v1622, %v1646
    %s1649 = scalar_lea.vmem [#allocation2], 2
    %1650 = vst.msk [vmem:[%s1649] sm:$0x3] %vm892, %v1647
    %s1651 = scalar_lea.vmem %s0, 512
    %v1652 = vld [vmem:[%s1651] sm:$0xff]
    %v1653 = vld [vmem:[%s1651 + $0x8] sm:$0xff]
    %v1654 = vld [vmem:[%s1651 + $0x10] sm:$0xff]
    %v1655 = vld [vmem:[%s1651 + $0x18] sm:$0xff]
    %v1656 = vld [vmem:[%s1651 + $0x20] sm:$0xff]
    %v1657 = vld [vmem:[%s1651 + $0x28] sm:$0xff]
    %v1658 = vld [vmem:[%s1651 + $0x30] sm:$0xff]
    %v1659 = vld [vmem:[%s1651 + $0x38] sm:$0xff]
    %v1660 = vld [vmem:[%s1651 + $0x40] sm:$0xff]
    %v1661 = vld [vmem:[%s1651 + $0x48] sm:$0xff]
    %v1662 = vld [vmem:[%s1651 + $0x50] sm:$0xff]
    %v1663 = vld [vmem:[%s1651 + $0x58] sm:$0xff]
    %v1664 = vld [vmem:[%s1651 + $0x60] sm:$0xff]
    %v1665 = vld [vmem:[%s1651 + $0x68] sm:$0xff]
    %v1666 = vld [vmem:[%s1651 + $0x70] sm:$0xff]
    %v1667 = vld [vmem:[%s1651 + $0x78] sm:$0xff]
    %v1668 = vld [vmem:[%s1651 + $0x80] sm:$0xff]
    %v1669 = vld [vmem:[%s1651 + $0x88] sm:$0xff]
    %v1670 = vld [vmem:[%s1651 + $0x90] sm:$0xff]
    %v1671 = vld [vmem:[%s1651 + $0x98] sm:$0xff]
    %v1672 = vld [vmem:[%s1651 + $0xa0] sm:$0xff]
    %v1673 = vld [vmem:[%s1651 + $0xa8] sm:$0xff]
    %v1674 = vld [vmem:[%s1651 + $0xb0] sm:$0xff]
    %v1675 = vld [vmem:[%s1651 + $0xb8] sm:$0xff]
    %v1676 = vld [vmem:[%s1651 + $0xc0] sm:$0xff]
    %v1677 = vld [vmem:[%s1651 + $0xc8] sm:$0xff]
    %v1678 = vld [vmem:[%s1651 + $0xd0] sm:$0xff]
    %v1679 = vld [vmem:[%s1651 + $0xd8] sm:$0xff]
    %v1680 = vld [vmem:[%s1651 + $0xe0] sm:$0xff]
    %v1681 = vld [vmem:[%s1651 + $0xe8] sm:$0xff]
    %v1682 = vld [vmem:[%s1651 + $0xf0] sm:$0xff]
    %v1683 = vld [vmem:[%s1651 + $0xf8] sm:$0xff]
    %1685 = vset.pattern.permute.xlu0 0
    %1686 = vperm.xlu0 %1685, %v1652
    %v1687 = vpop.permute.xlu0 %1686
    %1690 = vset.pattern.permute.xlu0 0
    %1691 = vperm.xlu0 %1690, %v1653
    %v1692 = vpop.permute.xlu0 %1691
    %1695 = vset.pattern.permute.xlu0 0
    %1696 = vperm.xlu0 %1695, %v1654
    %v1697 = vpop.permute.xlu0 %1696
    %1700 = vset.pattern.permute.xlu0 0
    %1701 = vperm.xlu0 %1700, %v1655
    %v1702 = vpop.permute.xlu0 %1701
    %1705 = vset.pattern.permute.xlu0 0
    %1706 = vperm.xlu0 %1705, %v1656
    %v1707 = vpop.permute.xlu0 %1706
    %1710 = vset.pattern.permute.xlu0 0
    %1711 = vperm.xlu0 %1710, %v1657
    %v1712 = vpop.permute.xlu0 %1711
    %1715 = vset.pattern.permute.xlu0 0
    %1716 = vperm.xlu0 %1715, %v1658
    %v1717 = vpop.permute.xlu0 %1716
    %1720 = vset.pattern.permute.xlu0 0
    %1721 = vperm.xlu0 %1720, %v1659
    %v1722 = vpop.permute.xlu0 %1721
    %1725 = vset.pattern.permute.xlu0 0
    %1726 = vperm.xlu0 %1725, %v1660
    %v1727 = vpop.permute.xlu0 %1726
    %1730 = vset.pattern.permute.xlu0 0
    %1731 = vperm.xlu0 %1730, %v1661
    %v1732 = vpop.permute.xlu0 %1731
    %1735 = vset.pattern.permute.xlu0 0
    %1736 = vperm.xlu0 %1735, %v1662
    %v1737 = vpop.permute.xlu0 %1736
    %1740 = vset.pattern.permute.xlu0 0
    %1741 = vperm.xlu0 %1740, %v1663
    %v1742 = vpop.permute.xlu0 %1741
    %1745 = vset.pattern.permute.xlu0 0
    %1746 = vperm.xlu0 %1745, %v1664
    %v1747 = vpop.permute.xlu0 %1746
    %1750 = vset.pattern.permute.xlu0 0
    %1751 = vperm.xlu0 %1750, %v1665
    %v1752 = vpop.permute.xlu0 %1751
    %1755 = vset.pattern.permute.xlu0 0
    %1756 = vperm.xlu0 %1755, %v1666
    %v1757 = vpop.permute.xlu0 %1756
    %1760 = vset.pattern.permute.xlu0 0
    %1761 = vperm.xlu0 %1760, %v1667
    %v1762 = vpop.permute.xlu0 %1761
    %1765 = vset.pattern.permute.xlu0 0
    %1766 = vperm.xlu0 %1765, %v1668
    %v1767 = vpop.permute.xlu0 %1766
    %1770 = vset.pattern.permute.xlu0 0
    %1771 = vperm.xlu0 %1770, %v1669
    %v1772 = vpop.permute.xlu0 %1771
    %1775 = vset.pattern.permute.xlu0 0
    %1776 = vperm.xlu0 %1775, %v1670
    %v1777 = vpop.permute.xlu0 %1776
    %1780 = vset.pattern.permute.xlu0 0
    %1781 = vperm.xlu0 %1780, %v1671
    %v1782 = vpop.permute.xlu0 %1781
    %1785 = vset.pattern.permute.xlu0 0
    %1786 = vperm.xlu0 %1785, %v1672
    %v1787 = vpop.permute.xlu0 %1786
    %1790 = vset.pattern.permute.xlu0 0
    %1791 = vperm.xlu0 %1790, %v1673
    %v1792 = vpop.permute.xlu0 %1791
    %1795 = vset.pattern.permute.xlu0 0
    %1796 = vperm.xlu0 %1795, %v1674
    %v1797 = vpop.permute.xlu0 %1796
    %1800 = vset.pattern.permute.xlu0 0
    %1801 = vperm.xlu0 %1800, %v1675
    %v1802 = vpop.permute.xlu0 %1801
    %1805 = vset.pattern.permute.xlu0 0
    %1806 = vperm.xlu0 %1805, %v1676
    %v1807 = vpop.permute.xlu0 %1806
    %1810 = vset.pattern.permute.xlu0 0
    %1811 = vperm.xlu0 %1810, %v1677
    %v1812 = vpop.permute.xlu0 %1811
    %1815 = vset.pattern.permute.xlu0 0
    %1816 = vperm.xlu0 %1815, %v1678
    %v1817 = vpop.permute.xlu0 %1816
    %1820 = vset.pattern.permute.xlu0 0
    %1821 = vperm.xlu0 %1820, %v1679
    %v1822 = vpop.permute.xlu0 %1821
    %1825 = vset.pattern.permute.xlu0 0
    %1826 = vperm.xlu0 %1825, %v1680
    %v1827 = vpop.permute.xlu0 %1826
    %1830 = vset.pattern.permute.xlu0 0
    %1831 = vperm.xlu0 %1830, %v1681
    %v1832 = vpop.permute.xlu0 %1831
    %1835 = vset.pattern.permute.xlu0 0
    %1836 = vperm.xlu0 %1835, %v1682
    %v1837 = vpop.permute.xlu0 %1836
    %1840 = vset.pattern.permute.xlu0 0
    %1841 = vperm.xlu0 %1840, %v1683
    %v1842 = vpop.permute.xlu0 %1841
    %v1844 = vmul.f32 %v1687, %v255
    %v1845 = vmul.f32 %v1692, %v255
    %v1846 = vmul.f32 %v1697, %v255
    %v1847 = vmul.f32 %v1702, %v255
    %v1848 = vmul.f32 %v1707, %v255
    %v1849 = vmul.f32 %v1712, %v255
    %v1850 = vmul.f32 %v1717, %v255
    %v1851 = vmul.f32 %v1722, %v255
    %v1852 = vmul.f32 %v1727, %v255
    %v1853 = vmul.f32 %v1732, %v255
    %v1854 = vmul.f32 %v1737, %v255
    %v1855 = vmul.f32 %v1742, %v255
    %v1856 = vmul.f32 %v1747, %v255
    %v1857 = vmul.f32 %v1752, %v255
    %v1858 = vmul.f32 %v1757, %v255
    %v1859 = vmul.f32 %v1762, %v255
    %v1860 = vmul.f32 %v1767, %v255
    %v1861 = vmul.f32 %v1772, %v255
    %v1862 = vmul.f32 %v1777, %v255
    %v1863 = vmul.f32 %v1782, %v255
    %v1864 = vmul.f32 %v1787, %v255
    %v1865 = vmul.f32 %v1792, %v255
    %v1866 = vmul.f32 %v1797, %v255
    %v1867 = vmul.f32 %v1802, %v255
    %v1868 = vmul.f32 %v1807, %v255
    %v1869 = vmul.f32 %v1812, %v255
    %v1870 = vmul.f32 %v1817, %v255
    %v1871 = vmul.f32 %v1822, %v255
    %v1872 = vmul.f32 %v1827, %v255
    %v1873 = vmul.f32 %v1832, %v255
    %v1874 = vmul.f32 %v1837, %v255
    %v1875 = vmul.f32 %v1842, %v255
    %1876 = vset.pattern.permute.xlu0 1
    %1877 = vperm.xlu0 %1876, %v1652
    %v1878 = vpop.permute.xlu0 %1877
    %1880 = vset.pattern.permute.xlu0 1
    %1881 = vperm.xlu0 %1880, %v1653
    %v1882 = vpop.permute.xlu0 %1881
    %1884 = vset.pattern.permute.xlu0 1
    %1885 = vperm.xlu0 %1884, %v1654
    %v1886 = vpop.permute.xlu0 %1885
    %1888 = vset.pattern.permute.xlu0 1
    %1889 = vperm.xlu0 %1888, %v1655
    %v1890 = vpop.permute.xlu0 %1889
    %1892 = vset.pattern.permute.xlu0 1
    %1893 = vperm.xlu0 %1892, %v1656
    %v1894 = vpop.permute.xlu0 %1893
    %1896 = vset.pattern.permute.xlu0 1
    %1897 = vperm.xlu0 %1896, %v1657
    %v1898 = vpop.permute.xlu0 %1897
    %1900 = vset.pattern.permute.xlu0 1
    %1901 = vperm.xlu0 %1900, %v1658
    %v1902 = vpop.permute.xlu0 %1901
    %1904 = vset.pattern.permute.xlu0 1
    %1905 = vperm.xlu0 %1904, %v1659
    %v1906 = vpop.permute.xlu0 %1905
    %1908 = vset.pattern.permute.xlu0 1
    %1909 = vperm.xlu0 %1908, %v1660
    %v1910 = vpop.permute.xlu0 %1909
    %1912 = vset.pattern.permute.xlu0 1
    %1913 = vperm.xlu0 %1912, %v1661
    %v1914 = vpop.permute.xlu0 %1913
    %1916 = vset.pattern.permute.xlu0 1
    %1917 = vperm.xlu0 %1916, %v1662
    %v1918 = vpop.permute.xlu0 %1917
    %1920 = vset.pattern.permute.xlu0 1
    %1921 = vperm.xlu0 %1920, %v1663
    %v1922 = vpop.permute.xlu0 %1921
    %1924 = vset.pattern.permute.xlu0 1
    %1925 = vperm.xlu0 %1924, %v1664
    %v1926 = vpop.permute.xlu0 %1925
    %1928 = vset.pattern.permute.xlu0 1
    %1929 = vperm.xlu0 %1928, %v1665
    %v1930 = vpop.permute.xlu0 %1929
    %1932 = vset.pattern.permute.xlu0 1
    %1933 = vperm.xlu0 %1932, %v1666
    %v1934 = vpop.permute.xlu0 %1933
    %1936 = vset.pattern.permute.xlu0 1
    %1937 = vperm.xlu0 %1936, %v1667
    %v1938 = vpop.permute.xlu0 %1937
    %1940 = vset.pattern.permute.xlu0 1
    %1941 = vperm.xlu0 %1940, %v1668
    %v1942 = vpop.permute.xlu0 %1941
    %1944 = vset.pattern.permute.xlu0 1
    %1945 = vperm.xlu0 %1944, %v1669
    %v1946 = vpop.permute.xlu0 %1945
    %1948 = vset.pattern.permute.xlu0 1
    %1949 = vperm.xlu0 %1948, %v1670
    %v1950 = vpop.permute.xlu0 %1949
    %1952 = vset.pattern.permute.xlu0 1
    %1953 = vperm.xlu0 %1952, %v1671
    %v1954 = vpop.permute.xlu0 %1953
    %1956 = vset.pattern.permute.xlu0 1
    %1957 = vperm.xlu0 %1956, %v1672
    %v1958 = vpop.permute.xlu0 %1957
    %1960 = vset.pattern.permute.xlu0 1
    %1961 = vperm.xlu0 %1960, %v1673
    %v1962 = vpop.permute.xlu0 %1961
    %1964 = vset.pattern.permute.xlu0 1
    %1965 = vperm.xlu0 %1964, %v1674
    %v1966 = vpop.permute.xlu0 %1965
    %1968 = vset.pattern.permute.xlu0 1
    %1969 = vperm.xlu0 %1968, %v1675
    %v1970 = vpop.permute.xlu0 %1969
    %1972 = vset.pattern.permute.xlu0 1
    %1973 = vperm.xlu0 %1972, %v1676
    %v1974 = vpop.permute.xlu0 %1973
    %1976 = vset.pattern.permute.xlu0 1
    %1977 = vperm.xlu0 %1976, %v1677
    %v1978 = vpop.permute.xlu0 %1977
    %1980 = vset.pattern.permute.xlu0 1
    %1981 = vperm.xlu0 %1980, %v1678
    %v1982 = vpop.permute.xlu0 %1981
    %1984 = vset.pattern.permute.xlu0 1
    %1985 = vperm.xlu0 %1984, %v1679
    %v1986 = vpop.permute.xlu0 %1985
    %1988 = vset.pattern.permute.xlu0 1
    %1989 = vperm.xlu0 %1988, %v1680
    %v1990 = vpop.permute.xlu0 %1989
    %1992 = vset.pattern.permute.xlu0 1
    %1993 = vperm.xlu0 %1992, %v1681
    %v1994 = vpop.permute.xlu0 %1993
    %1996 = vset.pattern.permute.xlu0 1
    %1997 = vperm.xlu0 %1996, %v1682
    %v1998 = vpop.permute.xlu0 %1997
    %2000 = vset.pattern.permute.xlu0 1
    %2001 = vperm.xlu0 %2000, %v1683
    %v2002 = vpop.permute.xlu0 %2001
    %v2004 = vmul.f32 %v1878, %v416
    %v2005 = vmul.f32 %v1882, %v416
    %v2006 = vmul.f32 %v1886, %v416
    %v2007 = vmul.f32 %v1890, %v416
    %v2008 = vmul.f32 %v1894, %v416
    %v2009 = vmul.f32 %v1898, %v416
    %v2010 = vmul.f32 %v1902, %v416
    %v2011 = vmul.f32 %v1906, %v416
    %v2012 = vmul.f32 %v1910, %v416
    %v2013 = vmul.f32 %v1914, %v416
    %v2014 = vmul.f32 %v1918, %v416
    %v2015 = vmul.f32 %v1922, %v416
    %v2016 = vmul.f32 %v1926, %v416
    %v2017 = vmul.f32 %v1930, %v416
    %v2018 = vmul.f32 %v1934, %v416
    %v2019 = vmul.f32 %v1938, %v416
    %v2020 = vmul.f32 %v1942, %v416
    %v2021 = vmul.f32 %v1946, %v416
    %v2022 = vmul.f32 %v1950, %v416
    %v2023 = vmul.f32 %v1954, %v416
    %v2024 = vmul.f32 %v1958, %v416
    %v2025 = vmul.f32 %v1962, %v416
    %v2026 = vmul.f32 %v1966, %v416
    %v2027 = vmul.f32 %v1970, %v416
    %v2028 = vmul.f32 %v1974, %v416
    %v2029 = vmul.f32 %v1978, %v416
    %v2030 = vmul.f32 %v1982, %v416
    %v2031 = vmul.f32 %v1986, %v416
    %v2032 = vmul.f32 %v1990, %v416
    %v2033 = vmul.f32 %v1994, %v416
    %v2034 = vmul.f32 %v1998, %v416
    %v2035 = vmul.f32 %v2002, %v416
    %v2036 = vadd.f32 %v1844, %v2004
    %v2037 = vadd.f32 %v1845, %v2005
    %v2038 = vadd.f32 %v1846, %v2006
    %v2039 = vadd.f32 %v1847, %v2007
    %v2040 = vadd.f32 %v1848, %v2008
    %v2041 = vadd.f32 %v1849, %v2009
    %v2042 = vadd.f32 %v1850, %v2010
    %v2043 = vadd.f32 %v1851, %v2011
    %v2044 = vadd.f32 %v1852, %v2012
    %v2045 = vadd.f32 %v1853, %v2013
    %v2046 = vadd.f32 %v1854, %v2014
    %v2047 = vadd.f32 %v1855, %v2015
    %v2048 = vadd.f32 %v1856, %v2016
    %v2049 = vadd.f32 %v1857, %v2017
    %v2050 = vadd.f32 %v1858, %v2018
    %v2051 = vadd.f32 %v1859, %v2019
    %v2052 = vadd.f32 %v1860, %v2020
    %v2053 = vadd.f32 %v1861, %v2021
    %v2054 = vadd.f32 %v1862, %v2022
    %v2055 = vadd.f32 %v1863, %v2023
    %v2056 = vadd.f32 %v1864, %v2024
    %v2057 = vadd.f32 %v1865, %v2025
    %v2058 = vadd.f32 %v1866, %v2026
    %v2059 = vadd.f32 %v1867, %v2027
    %v2060 = vadd.f32 %v1868, %v2028
    %v2061 = vadd.f32 %v1869, %v2029
    %v2062 = vadd.f32 %v1870, %v2030
    %v2063 = vadd.f32 %v1871, %v2031
    %v2064 = vadd.f32 %v1872, %v2032
    %v2065 = vadd.f32 %v1873, %v2033
    %v2066 = vadd.f32 %v1874, %v2034
    %v2067 = vadd.f32 %v1875, %v2035
    %v2068 = vperm.slane %v62, 2
    %v2069 = vadd.f32 %v2036, %v2068
    %v2070 = vadd.f32 %v2037, %v2068
    %v2071 = vadd.f32 %v2038, %v2068
    %v2072 = vadd.f32 %v2039, %v2068
    %v2073 = vadd.f32 %v2040, %v2068
    %v2074 = vadd.f32 %v2041, %v2068
    %v2075 = vadd.f32 %v2042, %v2068
    %v2076 = vadd.f32 %v2043, %v2068
    %v2077 = vadd.f32 %v2044, %v2068
    %v2078 = vadd.f32 %v2045, %v2068
    %v2079 = vadd.f32 %v2046, %v2068
    %v2080 = vadd.f32 %v2047, %v2068
    %v2081 = vadd.f32 %v2048, %v2068
    %v2082 = vadd.f32 %v2049, %v2068
    %v2083 = vadd.f32 %v2050, %v2068
    %v2084 = vadd.f32 %v2051, %v2068
    %v2085 = vadd.f32 %v2052, %v2068
    %v2086 = vadd.f32 %v2053, %v2068
    %v2087 = vadd.f32 %v2054, %v2068
    %v2088 = vadd.f32 %v2055, %v2068
    %v2089 = vadd.f32 %v2056, %v2068
    %v2090 = vadd.f32 %v2057, %v2068
    %v2091 = vadd.f32 %v2058, %v2068
    %v2092 = vadd.f32 %v2059, %v2068
    %v2093 = vadd.f32 %v2060, %v2068
    %v2094 = vadd.f32 %v2061, %v2068
    %v2095 = vadd.f32 %v2062, %v2068
    %v2096 = vadd.f32 %v2063, %v2068
    %v2097 = vadd.f32 %v2064, %v2068
    %v2098 = vadd.f32 %v2065, %v2068
    %v2099 = vadd.f32 %v2066, %v2068
    %v2100 = vadd.f32 %v2067, %v2068
    %v2101 = vtanh.pop %v2069
    %v2102 = vtanh.pop %v2070
    %v2103 = vtanh.pop %v2071
    %v2104 = vtanh.pop %v2072
    %v2105 = vtanh.pop %v2073
    %v2106 = vtanh.pop %v2074
    %v2107 = vtanh.pop %v2075
    %v2108 = vtanh.pop %v2076
    %v2109 = vtanh.pop %v2077
    %v2110 = vtanh.pop %v2078
    %v2111 = vtanh.pop %v2079
    %v2112 = vtanh.pop %v2080
    %v2113 = vtanh.pop %v2081
    %v2114 = vtanh.pop %v2082
    %v2115 = vtanh.pop %v2083
    %v2116 = vtanh.pop %v2084
    %v2117 = vtanh.pop %v2085
    %v2118 = vtanh.pop %v2086
    %v2119 = vtanh.pop %v2087
    %v2120 = vtanh.pop %v2088
    %v2121 = vtanh.pop %v2089
    %v2122 = vtanh.pop %v2090
    %v2123 = vtanh.pop %v2091
    %v2124 = vtanh.pop %v2092
    %v2125 = vtanh.pop %v2093
    %v2126 = vtanh.pop %v2094
    %v2127 = vtanh.pop %v2095
    %v2128 = vtanh.pop %v2096
    %v2129 = vtanh.pop %v2097
    %v2130 = vtanh.pop %v2098
    %v2131 = vtanh.pop %v2099
    %v2132 = vtanh.pop %v2100
    %v2134 = vsel %vm566, %v2101, 0
    %v2137 = vsel %vm566, %v2102, 0
    %v2140 = vsel %vm566, %v2103, 0
    %v2143 = vsel %vm566, %v2104, 0
    %v2146 = vsel %vm566, %v2105, 0
    %v2149 = vsel %vm566, %v2106, 0
    %v2152 = vsel %vm566, %v2107, 0
    %v2155 = vsel %vm566, %v2108, 0
    %v2158 = vsel %vm566, %v2109, 0
    %v2161 = vsel %vm566, %v2110, 0
    %v2164 = vsel %vm566, %v2111, 0
    %v2167 = vsel %vm566, %v2112, 0
    %v2170 = vsel %vm566, %v2113, 0
    %v2173 = vsel %vm566, %v2114, 0
    %v2176 = vsel %vm566, %v2115, 0
    %v2179 = vsel %vm566, %v2116, 0
    %v2182 = vsel %vm566, %v2117, 0
    %v2185 = vsel %vm566, %v2118, 0
    %v2188 = vsel %vm566, %v2119, 0
    %v2191 = vsel %vm566, %v2120, 0
    %v2194 = vsel %vm566, %v2121, 0
    %v2197 = vsel %vm566, %v2122, 0
    %v2200 = vsel %vm566, %v2123, 0
    %v2203 = vsel %vm566, %v2124, 0
    %v2206 = vsel %vm566, %v2125, 0
    %v2209 = vsel %vm566, %v2126, 0
    %v2212 = vsel %vm566, %v2127, 0
    %v2215 = vsel %vm566, %v2128, 0
    %v2218 = vsel %vm566, %v2129, 0
    %v2221 = vsel %vm566, %v2130, 0
    %v2224 = vsel %vm566, %v2131, 0
    %v2227 = vsel %vm566, %v2132, 0
    %2229 = vmatpush.xpose.msra.mxu0 %v2179
    %2230 = vmatpush.xpose.msra.mxu0 %v2176
    %2231 = vmatpush.xpose.msra.mxu0 %v2173
    %2232 = vmatpush.xpose.msra.mxu0 %v2170
    %2233 = vmatpush.xpose.msra.mxu0 %v2167
    %2234 = vmatpush.xpose.msra.mxu0 %v2164
    %2235 = vmatpush.xpose.msra.mxu0 %v2161
    %2236 = vmatpush.xpose.msra.mxu0 %v2158
    %2237 = vmatpush.xpose.msra.mxu0 %v2155
    %2238 = vmatpush.xpose.msra.mxu0 %v2152
    %2239 = vmatpush.xpose.msra.mxu0 %v2149
    %2240 = vmatpush.xpose.msra.mxu0 %v2146
    %2241 = vmatpush.xpose.msra.mxu0 %v2143
    %2242 = vmatpush.xpose.msra.mxu0 %v2140
    %2243 = vmatpush.xpose.msra.mxu0 %v2137
    %2244 = vmatpush.xpose.msra.mxu0 %v2134
    %2245 = vmatmul.f32.gmra.mxu0 %v568
    %v2246 = vpop.f32.mrf.mxu0
    %v2247 = vadd.f32 %v549, %v2246
    %2248 = vmatmul.f32.gmra.mxu0 %v571
    %v2249 = vpop.f32.mrf.mxu0
    %v2250 = vadd.f32 %v554, %v2249
    %2251 = vmatmul.f32.gmra.mxu0 %v574
    %v2252 = vpop.f32.mrf.mxu0
    %v2253 = vadd.f32 %v559, %v2252
    %2254 = vmatmul.f32.gmra.mxu0 %v577
    %v2255 = vpop.f32.mrf.mxu0
    %v2256 = vadd.f32 %v564, %v2255
    %2257 = vdwg.mxu0
    %2258 = vmatpush.xpose.msra.mxu0 %v2227
    %2259 = vmatpush.xpose.msra.mxu0 %v2224
    %2260 = vmatpush.xpose.msra.mxu0 %v2221
    %2261 = vmatpush.xpose.msra.mxu0 %v2218
    %2262 = vmatpush.xpose.msra.mxu0 %v2215
    %2263 = vmatpush.xpose.msra.mxu0 %v2212
    %2264 = vmatpush.xpose.msra.mxu0 %v2209
    %2265 = vmatpush.xpose.msra.mxu0 %v2206
    %2266 = vmatpush.xpose.msra.mxu0 %v2203
    %2267 = vmatpush.xpose.msra.mxu0 %v2200
    %2268 = vmatpush.xpose.msra.mxu0 %v2197
    %2269 = vmatpush.xpose.msra.mxu0 %v2194
    %2270 = vmatpush.xpose.msra.mxu0 %v2191
    %2271 = vmatpush.xpose.msra.mxu0 %v2188
    %2272 = vmatpush.xpose.msra.mxu0 %v2185
    %2273 = vmatpush.xpose.msra.mxu0 %v2182
    %2274 = vmatmul.f32.gmra.mxu0 %v568
    %v2275 = vpop.f32.mrf.mxu0
    %v2276 = vadd.f32 %v549, %v2275
    %2277 = vmatmul.f32.gmra.mxu0 %v571
    %v2278 = vpop.f32.mrf.mxu0
    %v2279 = vadd.f32 %v554, %v2278
    %2280 = vmatmul.f32.gmra.mxu0 %v574
    %v2281 = vpop.f32.mrf.mxu0
    %v2282 = vadd.f32 %v559, %v2281
    %2283 = vmatmul.f32.gmra.mxu0 %v577
    %v2284 = vpop.f32.mrf.mxu0
    %v2285 = vadd.f32 %v564, %v2284
    %2286 = vdwg.mxu0
    %v2287 = vtanh.pop %v2247
    %v2288 = vtanh.pop %v2276
    %v2289 = vtanh.pop %v2250
    %v2290 = vtanh.pop %v2279
    %v2291 = vtanh.pop %v2253
    %v2292 = vtanh.pop %v2282
    %v2293 = vtanh.pop %v2256
    %v2294 = vtanh.pop %v2285
    %2295 = vmatpush.msra.mxu0 0.0
    %2296 = vmatpush.msra.mxu0 0.0
    %2297 = vmatpush.msra.mxu0 0.0
    %2298 = vmatpush.msra.mxu0 0.0
    %2299 = vmatpush.msra.mxu0 0.0
    %2300 = vmatpush.msra.mxu0 0.0
    %2301 = vmatpush.msra.mxu0 0.0
    %2302 = vmatpush.msra.mxu0 0.0
    %2303 = vmatpush.msra.mxu0 0.0
    %2304 = vmatpush.msra.mxu0 0.0
    %2305 = vmatpush.msra.mxu0 0.0
    %2306 = vmatpush.msra.mxu0 0.0
    %2307 = vmatpush.msra.mxu0 %v2293
    %2308 = vmatpush.msra.mxu0 %v2291
    %2309 = vmatpush.msra.mxu0 %v2289
    %2310 = vmatpush.msra.mxu0 %v2287
    %2311 = vmatmul.f32.gmra.mxu0 %v758
    %v2312 = vpop.f32.mrf.mxu0
    %v2313 = vadd.f32 %v743, %v2312
    %2314 = vmatmul.f32.gmra.mxu0 %v761
    %v2315 = vpop.f32.mrf.mxu0
    %v2316 = vadd.f32 %v747, %v2315
    %2317 = vmatmul.f32.gmra.mxu0 %v764
    %v2318 = vpop.f32.mrf.mxu0
    %v2319 = vadd.f32 %v751, %v2318
    %2320 = vmatmul.f32.gmra.mxu0 %v767
    %v2321 = vpop.f32.mrf.mxu0
    %v2322 = vadd.f32 %v755, %v2321
    %2323 = vdwg.mxu0
    %2324 = vmatpush.msra.mxu0 0.0
    %2325 = vmatpush.msra.mxu0 0.0
    %2326 = vmatpush.msra.mxu0 0.0
    %2327 = vmatpush.msra.mxu0 0.0
    %2328 = vmatpush.msra.mxu0 0.0
    %2329 = vmatpush.msra.mxu0 0.0
    %2330 = vmatpush.msra.mxu0 0.0
    %2331 = vmatpush.msra.mxu0 0.0
    %2332 = vmatpush.msra.mxu0 0.0
    %2333 = vmatpush.msra.mxu0 0.0
    %2334 = vmatpush.msra.mxu0 0.0
    %2335 = vmatpush.msra.mxu0 0.0
    %2336 = vmatpush.msra.mxu0 %v2294
    %2337 = vmatpush.msra.mxu0 %v2292
    %2338 = vmatpush.msra.mxu0 %v2290
    %2339 = vmatpush.msra.mxu0 %v2288
    %2340 = vmatmul.f32.gmra.mxu0 %v758
    %v2341 = vpop.f32.mrf.mxu0
    %v2342 = vadd.f32 %v743, %v2341
    %2343 = vmatmul.f32.gmra.mxu0 %v761
    %v2344 = vpop.f32.mrf.mxu0
    %v2345 = vadd.f32 %v747, %v2344
    %2346 = vmatmul.f32.gmra.mxu0 %v764
    %v2347 = vpop.f32.mrf.mxu0
    %v2348 = vadd.f32 %v751, %v2347
    %2349 = vmatmul.f32.gmra.mxu0 %v767
    %v2350 = vpop.f32.mrf.mxu0
    %v2351 = vadd.f32 %v755, %v2350
    %2352 = vdwg.mxu0
    %v2353 = vtanh.pop %v2313
    %v2354 = vtanh.pop %v2342
    %v2355 = vtanh.pop %v2316
    %v2356 = vtanh.pop %v2345
    %v2357 = vtanh.pop %v2319
    %v2358 = vtanh.pop %v2348
    %v2359 = vtanh.pop %v2322
    %v2360 = vtanh.pop %v2351
    %2361 = vmatpush.msra.mxu0 0.0
    %2362 = vmatpush.msra.mxu0 0.0
    %2363 = vmatpush.msra.mxu0 0.0
    %2364 = vmatpush.msra.mxu0 0.0
    %2365 = vmatpush.msra.mxu0 0.0
    %2366 = vmatpush.msra.mxu0 0.0
    %2367 = vmatpush.msra.mxu0 0.0
    %2368 = vmatpush.msra.mxu0 0.0
    %2369 = vmatpush.msra.mxu0 0.0
    %2370 = vmatpush.msra.mxu0 0.0
    %2371 = vmatpush.msra.mxu0 0.0
    %2372 = vmatpush.msra.mxu0 0.0
    %2373 = vmatpush.msra.mxu0 %v2359
    %2374 = vmatpush.msra.mxu0 %v2357
    %2375 = vmatpush.msra.mxu0 %v2355
    %2376 = vmatpush.msra.mxu0 %v2353
    %2377 = vmatmul.f32.gmra.mxu0 %v841
    %v2378 = vpop.f32.mrf.mxu0
    %v2379 = vadd.f32 %v837, %v2378
    %2380 = vdwg.mxu0
    %2381 = vmatpush.msra.mxu0 0.0
    %2382 = vmatpush.msra.mxu0 0.0
    %2383 = vmatpush.msra.mxu0 0.0
    %2384 = vmatpush.msra.mxu0 0.0
    %2385 = vmatpush.msra.mxu0 0.0
    %2386 = vmatpush.msra.mxu0 0.0
    %2387 = vmatpush.msra.mxu0 0.0
    %2388 = vmatpush.msra.mxu0 0.0
    %2389 = vmatpush.msra.mxu0 0.0
    %2390 = vmatpush.msra.mxu0 0.0
    %2391 = vmatpush.msra.mxu0 0.0
    %2392 = vmatpush.msra.mxu0 0.0
    %2393 = vmatpush.msra.mxu0 %v2360
    %2394 = vmatpush.msra.mxu0 %v2358
    %2395 = vmatpush.msra.mxu0 %v2356
    %2396 = vmatpush.msra.mxu0 %v2354
    %2397 = vmatmul.f32.gmra.mxu0 %v841
    %v2398 = vpop.f32.mrf.mxu0
    %v2399 = vadd.f32 %v837, %v2398
    %2400 = vdwg.mxu0
    %v2403 = vrot.slane %v2399, 7
    %v2404 = vsel %vm886, %v2379, %v2403
    %s2406 = scalar_lea.vmem [#allocation2], 4
    %2407 = vst.msk [vmem:[%s2406] sm:$0x3] %vm892, %v2404
    %s2408 = scalar_lea.vmem %s0, 768
    %v2409 = vld [vmem:[%s2408] sm:$0xff]
    %v2410 = vld [vmem:[%s2408 + $0x8] sm:$0xff]
    %v2411 = vld [vmem:[%s2408 + $0x10] sm:$0xff]
    %v2412 = vld [vmem:[%s2408 + $0x18] sm:$0xff]
    %v2413 = vld [vmem:[%s2408 + $0x20] sm:$0xff]
    %v2414 = vld [vmem:[%s2408 + $0x28] sm:$0xff]
    %v2415 = vld [vmem:[%s2408 + $0x30] sm:$0xff]
    %v2416 = vld [vmem:[%s2408 + $0x38] sm:$0xff]
    %v2417 = vld [vmem:[%s2408 + $0x40] sm:$0xff]
    %v2418 = vld [vmem:[%s2408 + $0x48] sm:$0xff]
    %v2419 = vld [vmem:[%s2408 + $0x50] sm:$0xff]
    %v2420 = vld [vmem:[%s2408 + $0x58] sm:$0xff]
    %v2421 = vld [vmem:[%s2408 + $0x60] sm:$0xff]
    %v2422 = vld [vmem:[%s2408 + $0x68] sm:$0xff]
    %v2423 = vld [vmem:[%s2408 + $0x70] sm:$0xff]
    %v2424 = vld [vmem:[%s2408 + $0x78] sm:$0xff]
    %v2425 = vld [vmem:[%s2408 + $0x80] sm:$0xff]
    %v2426 = vld [vmem:[%s2408 + $0x88] sm:$0xff]
    %v2427 = vld [vmem:[%s2408 + $0x90] sm:$0xff]
    %v2428 = vld [vmem:[%s2408 + $0x98] sm:$0xff]
    %v2429 = vld [vmem:[%s2408 + $0xa0] sm:$0xff]
    %v2430 = vld [vmem:[%s2408 + $0xa8] sm:$0xff]
    %v2431 = vld [vmem:[%s2408 + $0xb0] sm:$0xff]
    %v2432 = vld [vmem:[%s2408 + $0xb8] sm:$0xff]
    %v2433 = vld [vmem:[%s2408 + $0xc0] sm:$0xff]
    %v2434 = vld [vmem:[%s2408 + $0xc8] sm:$0xff]
    %v2435 = vld [vmem:[%s2408 + $0xd0] sm:$0xff]
    %v2436 = vld [vmem:[%s2408 + $0xd8] sm:$0xff]
    %v2437 = vld [vmem:[%s2408 + $0xe0] sm:$0xff]
    %v2438 = vld [vmem:[%s2408 + $0xe8] sm:$0xff]
    %v2439 = vld [vmem:[%s2408 + $0xf0] sm:$0xff]
    %v2440 = vld [vmem:[%s2408 + $0xf8] sm:$0xff]
    %2442 = vset.pattern.permute.xlu0 0
    %2443 = vperm.xlu0 %2442, %v2409
    %v2444 = vpop.permute.xlu0 %2443
    %2447 = vset.pattern.permute.xlu0 0
    %2448 = vperm.xlu0 %2447, %v2410
    %v2449 = vpop.permute.xlu0 %2448
    %2452 = vset.pattern.permute.xlu0 0
    %2453 = vperm.xlu0 %2452, %v2411
    %v2454 = vpop.permute.xlu0 %2453
    %2457 = vset.pattern.permute.xlu0 0
    %2458 = vperm.xlu0 %2457, %v2412
    %v2459 = vpop.permute.xlu0 %2458
    %2462 = vset.pattern.permute.xlu0 0
    %2463 = vperm.xlu0 %2462, %v2413
    %v2464 = vpop.permute.xlu0 %2463
    %2467 = vset.pattern.permute.xlu0 0
    %2468 = vperm.xlu0 %2467, %v2414
    %v2469 = vpop.permute.xlu0 %2468
    %2472 = vset.pattern.permute.xlu0 0
    %2473 = vperm.xlu0 %2472, %v2415
    %v2474 = vpop.permute.xlu0 %2473
    %2477 = vset.pattern.permute.xlu0 0
    %2478 = vperm.xlu0 %2477, %v2416
    %v2479 = vpop.permute.xlu0 %2478
    %2482 = vset.pattern.permute.xlu0 0
    %2483 = vperm.xlu0 %2482, %v2417
    %v2484 = vpop.permute.xlu0 %2483
    %2487 = vset.pattern.permute.xlu0 0
    %2488 = vperm.xlu0 %2487, %v2418
    %v2489 = vpop.permute.xlu0 %2488
    %2492 = vset.pattern.permute.xlu0 0
    %2493 = vperm.xlu0 %2492, %v2419
    %v2494 = vpop.permute.xlu0 %2493
    %2497 = vset.pattern.permute.xlu0 0
    %2498 = vperm.xlu0 %2497, %v2420
    %v2499 = vpop.permute.xlu0 %2498
    %2502 = vset.pattern.permute.xlu0 0
    %2503 = vperm.xlu0 %2502, %v2421
    %v2504 = vpop.permute.xlu0 %2503
    %2507 = vset.pattern.permute.xlu0 0
    %2508 = vperm.xlu0 %2507, %v2422
    %v2509 = vpop.permute.xlu0 %2508
    %2512 = vset.pattern.permute.xlu0 0
    %2513 = vperm.xlu0 %2512, %v2423
    %v2514 = vpop.permute.xlu0 %2513
    %2517 = vset.pattern.permute.xlu0 0
    %2518 = vperm.xlu0 %2517, %v2424
    %v2519 = vpop.permute.xlu0 %2518
    %2522 = vset.pattern.permute.xlu0 0
    %2523 = vperm.xlu0 %2522, %v2425
    %v2524 = vpop.permute.xlu0 %2523
    %2527 = vset.pattern.permute.xlu0 0
    %2528 = vperm.xlu0 %2527, %v2426
    %v2529 = vpop.permute.xlu0 %2528
    %2532 = vset.pattern.permute.xlu0 0
    %2533 = vperm.xlu0 %2532, %v2427
    %v2534 = vpop.permute.xlu0 %2533
    %2537 = vset.pattern.permute.xlu0 0
    %2538 = vperm.xlu0 %2537, %v2428
    %v2539 = vpop.permute.xlu0 %2538
    %2542 = vset.pattern.permute.xlu0 0
    %2543 = vperm.xlu0 %2542, %v2429
    %v2544 = vpop.permute.xlu0 %2543
    %2547 = vset.pattern.permute.xlu0 0
    %2548 = vperm.xlu0 %2547, %v2430
    %v2549 = vpop.permute.xlu0 %2548
    %2552 = vset.pattern.permute.xlu0 0
    %2553 = vperm.xlu0 %2552, %v2431
    %v2554 = vpop.permute.xlu0 %2553
    %2557 = vset.pattern.permute.xlu0 0
    %2558 = vperm.xlu0 %2557, %v2432
    %v2559 = vpop.permute.xlu0 %2558
    %2562 = vset.pattern.permute.xlu0 0
    %2563 = vperm.xlu0 %2562, %v2433
    %v2564 = vpop.permute.xlu0 %2563
    %2567 = vset.pattern.permute.xlu0 0
    %2568 = vperm.xlu0 %2567, %v2434
    %v2569 = vpop.permute.xlu0 %2568
    %2572 = vset.pattern.permute.xlu0 0
    %2573 = vperm.xlu0 %2572, %v2435
    %v2574 = vpop.permute.xlu0 %2573
    %2577 = vset.pattern.permute.xlu0 0
    %2578 = vperm.xlu0 %2577, %v2436
    %v2579 = vpop.permute.xlu0 %2578
    %2582 = vset.pattern.permute.xlu0 0
    %2583 = vperm.xlu0 %2582, %v2437
    %v2584 = vpop.permute.xlu0 %2583
    %2587 = vset.pattern.permute.xlu0 0
    %2588 = vperm.xlu0 %2587, %v2438
    %v2589 = vpop.permute.xlu0 %2588
    %2592 = vset.pattern.permute.xlu0 0
    %2593 = vperm.xlu0 %2592, %v2439
    %v2594 = vpop.permute.xlu0 %2593
    %2597 = vset.pattern.permute.xlu0 0
    %2598 = vperm.xlu0 %2597, %v2440
    %v2599 = vpop.permute.xlu0 %2598
    %v2601 = vmul.f32 %v2444, %v255
    %v2602 = vmul.f32 %v2449, %v255
    %v2603 = vmul.f32 %v2454, %v255
    %v2604 = vmul.f32 %v2459, %v255
    %v2605 = vmul.f32 %v2464, %v255
    %v2606 = vmul.f32 %v2469, %v255
    %v2607 = vmul.f32 %v2474, %v255
    %v2608 = vmul.f32 %v2479, %v255
    %v2609 = vmul.f32 %v2484, %v255
    %v2610 = vmul.f32 %v2489, %v255
    %v2611 = vmul.f32 %v2494, %v255
    %v2612 = vmul.f32 %v2499, %v255
    %v2613 = vmul.f32 %v2504, %v255
    %v2614 = vmul.f32 %v2509, %v255
    %v2615 = vmul.f32 %v2514, %v255
    %v2616 = vmul.f32 %v2519, %v255
    %v2617 = vmul.f32 %v2524, %v255
    %v2618 = vmul.f32 %v2529, %v255
    %v2619 = vmul.f32 %v2534, %v255
    %v2620 = vmul.f32 %v2539, %v255
    %v2621 = vmul.f32 %v2544, %v255
    %v2622 = vmul.f32 %v2549, %v255
    %v2623 = vmul.f32 %v2554, %v255
    %v2624 = vmul.f32 %v2559, %v255
    %v2625 = vmul.f32 %v2564, %v255
    %v2626 = vmul.f32 %v2569, %v255
    %v2627 = vmul.f32 %v2574, %v255
    %v2628 = vmul.f32 %v2579, %v255
    %v2629 = vmul.f32 %v2584, %v255
    %v2630 = vmul.f32 %v2589, %v255
    %v2631 = vmul.f32 %v2594, %v255
    %v2632 = vmul.f32 %v2599, %v255
    %2633 = vset.pattern.permute.xlu0 1
    %2634 = vperm.xlu0 %2633, %v2409
    %v2635 = vpop.permute.xlu0 %2634
    %2637 = vset.pattern.permute.xlu0 1
    %2638 = vperm.xlu0 %2637, %v2410
    %v2639 = vpop.permute.xlu0 %2638
    %2641 = vset.pattern.permute.xlu0 1
    %2642 = vperm.xlu0 %2641, %v2411
    %v2643 = vpop.permute.xlu0 %2642
    %2645 = vset.pattern.permute.xlu0 1
    %2646 = vperm.xlu0 %2645, %v2412
    %v2647 = vpop.permute.xlu0 %2646
    %2649 = vset.pattern.permute.xlu0 1
    %2650 = vperm.xlu0 %2649, %v2413
    %v2651 = vpop.permute.xlu0 %2650
    %2653 = vset.pattern.permute.xlu0 1
    %2654 = vperm.xlu0 %2653, %v2414
    %v2655 = vpop.permute.xlu0 %2654
    %2657 = vset.pattern.permute.xlu0 1
    %2658 = vperm.xlu0 %2657, %v2415
    %v2659 = vpop.permute.xlu0 %2658
    %2661 = vset.pattern.permute.xlu0 1
    %2662 = vperm.xlu0 %2661, %v2416
    %v2663 = vpop.permute.xlu0 %2662
    %2665 = vset.pattern.permute.xlu0 1
    %2666 = vperm.xlu0 %2665, %v2417
    %v2667 = vpop.permute.xlu0 %2666
    %2669 = vset.pattern.permute.xlu0 1
    %2670 = vperm.xlu0 %2669, %v2418
    %v2671 = vpop.permute.xlu0 %2670
    %2673 = vset.pattern.permute.xlu0 1
    %2674 = vperm.xlu0 %2673, %v2419
    %v2675 = vpop.permute.xlu0 %2674
    %2677 = vset.pattern.permute.xlu0 1
    %2678 = vperm.xlu0 %2677, %v2420
    %v2679 = vpop.permute.xlu0 %2678
    %2681 = vset.pattern.permute.xlu0 1
    %2682 = vperm.xlu0 %2681, %v2421
    %v2683 = vpop.permute.xlu0 %2682
    %2685 = vset.pattern.permute.xlu0 1
    %2686 = vperm.xlu0 %2685, %v2422
    %v2687 = vpop.permute.xlu0 %2686
    %2689 = vset.pattern.permute.xlu0 1
    %2690 = vperm.xlu0 %2689, %v2423
    %v2691 = vpop.permute.xlu0 %2690
    %2693 = vset.pattern.permute.xlu0 1
    %2694 = vperm.xlu0 %2693, %v2424
    %v2695 = vpop.permute.xlu0 %2694
    %2697 = vset.pattern.permute.xlu0 1
    %2698 = vperm.xlu0 %2697, %v2425
    %v2699 = vpop.permute.xlu0 %2698
    %2701 = vset.pattern.permute.xlu0 1
    %2702 = vperm.xlu0 %2701, %v2426
    %v2703 = vpop.permute.xlu0 %2702
    %2705 = vset.pattern.permute.xlu0 1
    %2706 = vperm.xlu0 %2705, %v2427
    %v2707 = vpop.permute.xlu0 %2706
    %2709 = vset.pattern.permute.xlu0 1
    %2710 = vperm.xlu0 %2709, %v2428
    %v2711 = vpop.permute.xlu0 %2710
    %2713 = vset.pattern.permute.xlu0 1
    %2714 = vperm.xlu0 %2713, %v2429
    %v2715 = vpop.permute.xlu0 %2714
    %2717 = vset.pattern.permute.xlu0 1
    %2718 = vperm.xlu0 %2717, %v2430
    %v2719 = vpop.permute.xlu0 %2718
    %2721 = vset.pattern.permute.xlu0 1
    %2722 = vperm.xlu0 %2721, %v2431
    %v2723 = vpop.permute.xlu0 %2722
    %2725 = vset.pattern.permute.xlu0 1
    %2726 = vperm.xlu0 %2725, %v2432
    %v2727 = vpop.permute.xlu0 %2726
    %2729 = vset.pattern.permute.xlu0 1
    %2730 = vperm.xlu0 %2729, %v2433
    %v2731 = vpop.permute.xlu0 %2730
    %2733 = vset.pattern.permute.xlu0 1
    %2734 = vperm.xlu0 %2733, %v2434
    %v2735 = vpop.permute.xlu0 %2734
    %2737 = vset.pattern.permute.xlu0 1
    %2738 = vperm.xlu0 %2737, %v2435
    %v2739 = vpop.permute.xlu0 %2738
    %2741 = vset.pattern.permute.xlu0 1
    %2742 = vperm.xlu0 %2741, %v2436
    %v2743 = vpop.permute.xlu0 %2742
    %2745 = vset.pattern.permute.xlu0 1
    %2746 = vperm.xlu0 %2745, %v2437
    %v2747 = vpop.permute.xlu0 %2746
    %2749 = vset.pattern.permute.xlu0 1
    %2750 = vperm.xlu0 %2749, %v2438
    %v2751 = vpop.permute.xlu0 %2750
    %2753 = vset.pattern.permute.xlu0 1
    %2754 = vperm.xlu0 %2753, %v2439
    %v2755 = vpop.permute.xlu0 %2754
    %2757 = vset.pattern.permute.xlu0 1
    %2758 = vperm.xlu0 %2757, %v2440
    %v2759 = vpop.permute.xlu0 %2758
    %v2761 = vmul.f32 %v2635, %v416
    %v2762 = vmul.f32 %v2639, %v416
    %v2763 = vmul.f32 %v2643, %v416
    %v2764 = vmul.f32 %v2647, %v416
    %v2765 = vmul.f32 %v2651, %v416
    %v2766 = vmul.f32 %v2655, %v416
    %v2767 = vmul.f32 %v2659, %v416
    %v2768 = vmul.f32 %v2663, %v416
    %v2769 = vmul.f32 %v2667, %v416
    %v2770 = vmul.f32 %v2671, %v416
    %v2771 = vmul.f32 %v2675, %v416
    %v2772 = vmul.f32 %v2679, %v416
    %v2773 = vmul.f32 %v2683, %v416
    %v2774 = vmul.f32 %v2687, %v416
    %v2775 = vmul.f32 %v2691, %v416
    %v2776 = vmul.f32 %v2695, %v416
    %v2777 = vmul.f32 %v2699, %v416
    %v2778 = vmul.f32 %v2703, %v416
    %v2779 = vmul.f32 %v2707, %v416
    %v2780 = vmul.f32 %v2711, %v416
    %v2781 = vmul.f32 %v2715, %v416
    %v2782 = vmul.f32 %v2719, %v416
    %v2783 = vmul.f32 %v2723, %v416
    %v2784 = vmul.f32 %v2727, %v416
    %v2785 = vmul.f32 %v2731, %v416
    %v2786 = vmul.f32 %v2735, %v416
    %v2787 = vmul.f32 %v2739, %v416
    %v2788 = vmul.f32 %v2743, %v416
    %v2789 = vmul.f32 %v2747, %v416
    %v2790 = vmul.f32 %v2751, %v416
    %v2791 = vmul.f32 %v2755, %v416
    %v2792 = vmul.f32 %v2759, %v416
    %v2793 = vadd.f32 %v2601, %v2761
    %v2794 = vadd.f32 %v2602, %v2762
    %v2795 = vadd.f32 %v2603, %v2763
    %v2796 = vadd.f32 %v2604, %v2764
    %v2797 = vadd.f32 %v2605, %v2765
    %v2798 = vadd.f32 %v2606, %v2766
    %v2799 = vadd.f32 %v2607, %v2767
    %v2800 = vadd.f32 %v2608, %v2768
    %v2801 = vadd.f32 %v2609, %v2769
    %v2802 = vadd.f32 %v2610, %v2770
    %v2803 = vadd.f32 %v2611, %v2771
    %v2804 = vadd.f32 %v2612, %v2772
    %v2805 = vadd.f32 %v2613, %v2773
    %v2806 = vadd.f32 %v2614, %v2774
    %v2807 = vadd.f32 %v2615, %v2775
    %v2808 = vadd.f32 %v2616, %v2776
    %v2809 = vadd.f32 %v2617, %v2777
    %v2810 = vadd.f32 %v2618, %v2778
    %v2811 = vadd.f32 %v2619, %v2779
    %v2812 = vadd.f32 %v2620, %v2780
    %v2813 = vadd.f32 %v2621, %v2781
    %v2814 = vadd.f32 %v2622, %v2782
    %v2815 = vadd.f32 %v2623, %v2783
    %v2816 = vadd.f32 %v2624, %v2784
    %v2817 = vadd.f32 %v2625, %v2785
    %v2818 = vadd.f32 %v2626, %v2786
    %v2819 = vadd.f32 %v2627, %v2787
    %v2820 = vadd.f32 %v2628, %v2788
    %v2821 = vadd.f32 %v2629, %v2789
    %v2822 = vadd.f32 %v2630, %v2790
    %v2823 = vadd.f32 %v2631, %v2791
    %v2824 = vadd.f32 %v2632, %v2792
    %v2825 = vperm.slane %v62, 3
    %v2826 = vadd.f32 %v2793, %v2825
    %v2827 = vadd.f32 %v2794, %v2825
    %v2828 = vadd.f32 %v2795, %v2825
    %v2829 = vadd.f32 %v2796, %v2825
    %v2830 = vadd.f32 %v2797, %v2825
    %v2831 = vadd.f32 %v2798, %v2825
    %v2832 = vadd.f32 %v2799, %v2825
    %v2833 = vadd.f32 %v2800, %v2825
    %v2834 = vadd.f32 %v2801, %v2825
    %v2835 = vadd.f32 %v2802, %v2825
    %v2836 = vadd.f32 %v2803, %v2825
    %v2837 = vadd.f32 %v2804, %v2825
    %v2838 = vadd.f32 %v2805, %v2825
    %v2839 = vadd.f32 %v2806, %v2825
    %v2840 = vadd.f32 %v2807, %v2825
    %v2841 = vadd.f32 %v2808, %v2825
    %v2842 = vadd.f32 %v2809, %v2825
    %v2843 = vadd.f32 %v2810, %v2825
    %v2844 = vadd.f32 %v2811, %v2825
    %v2845 = vadd.f32 %v2812, %v2825
    %v2846 = vadd.f32 %v2813, %v2825
    %v2847 = vadd.f32 %v2814, %v2825
    %v2848 = vadd.f32 %v2815, %v2825
    %v2849 = vadd.f32 %v2816, %v2825
    %v2850 = vadd.f32 %v2817, %v2825
    %v2851 = vadd.f32 %v2818, %v2825
    %v2852 = vadd.f32 %v2819, %v2825
    %v2853 = vadd.f32 %v2820, %v2825
    %v2854 = vadd.f32 %v2821, %v2825
    %v2855 = vadd.f32 %v2822, %v2825
    %v2856 = vadd.f32 %v2823, %v2825
    %v2857 = vadd.f32 %v2824, %v2825
    %v2858 = vtanh.pop %v2826
    %v2859 = vtanh.pop %v2827
    %v2860 = vtanh.pop %v2828
    %v2861 = vtanh.pop %v2829
    %v2862 = vtanh.pop %v2830
    %v2863 = vtanh.pop %v2831
    %v2864 = vtanh.pop %v2832
    %v2865 = vtanh.pop %v2833
    %v2866 = vtanh.pop %v2834
    %v2867 = vtanh.pop %v2835
    %v2868 = vtanh.pop %v2836
    %v2869 = vtanh.pop %v2837
    %v2870 = vtanh.pop %v2838
    %v2871 = vtanh.pop %v2839
    %v2872 = vtanh.pop %v2840
    %v2873 = vtanh.pop %v2841
    %v2874 = vtanh.pop %v2842
    %v2875 = vtanh.pop %v2843
    %v2876 = vtanh.pop %v2844
    %v2877 = vtanh.pop %v2845
    %v2878 = vtanh.pop %v2846
    %v2879 = vtanh.pop %v2847
    %v2880 = vtanh.pop %v2848
    %v2881 = vtanh.pop %v2849
    %v2882 = vtanh.pop %v2850
    %v2883 = vtanh.pop %v2851
    %v2884 = vtanh.pop %v2852
    %v2885 = vtanh.pop %v2853
    %v2886 = vtanh.pop %v2854
    %v2887 = vtanh.pop %v2855
    %v2888 = vtanh.pop %v2856
    %v2889 = vtanh.pop %v2857
    %v2891 = vsel %vm566, %v2858, 0
    %v2894 = vsel %vm566, %v2859, 0
    %v2897 = vsel %vm566, %v2860, 0
    %v2900 = vsel %vm566, %v2861, 0
    %v2903 = vsel %vm566, %v2862, 0
    %v2906 = vsel %vm566, %v2863, 0
    %v2909 = vsel %vm566, %v2864, 0
    %v2912 = vsel %vm566, %v2865, 0
    %v2915 = vsel %vm566, %v2866, 0
    %v2918 = vsel %vm566, %v2867, 0
    %v2921 = vsel %vm566, %v2868, 0
    %v2924 = vsel %vm566, %v2869, 0
    %v2927 = vsel %vm566, %v2870, 0
    %v2930 = vsel %vm566, %v2871, 0
    %v2933 = vsel %vm566, %v2872, 0
    %v2936 = vsel %vm566, %v2873, 0
    %v2939 = vsel %vm566, %v2874, 0
    %v2942 = vsel %vm566, %v2875, 0
    %v2945 = vsel %vm566, %v2876, 0
    %v2948 = vsel %vm566, %v2877, 0
    %v2951 = vsel %vm566, %v2878, 0
    %v2954 = vsel %vm566, %v2879, 0
    %v2957 = vsel %vm566, %v2880, 0
    %v2960 = vsel %vm566, %v2881, 0
    %v2963 = vsel %vm566, %v2882, 0
    %v2966 = vsel %vm566, %v2883, 0
    %v2969 = vsel %vm566, %v2884, 0
    %v2972 = vsel %vm566, %v2885, 0
    %v2975 = vsel %vm566, %v2886, 0
    %v2978 = vsel %vm566, %v2887, 0
    %v2981 = vsel %vm566, %v2888, 0
    %v2984 = vsel %vm566, %v2889, 0
    %2986 = vmatpush.xpose.msra.mxu0 %v2936
    %2987 = vmatpush.xpose.msra.mxu0 %v2933
    %2988 = vmatpush.xpose.msra.mxu0 %v2930
    %2989 = vmatpush.xpose.msra.mxu0 %v2927
    %2990 = vmatpush.xpose.msra.mxu0 %v2924
    %2991 = vmatpush.xpose.msra.mxu0 %v2921
    %2992 = vmatpush.xpose.msra.mxu0 %v2918
    %2993 = vmatpush.xpose.msra.mxu0 %v2915
    %2994 = vmatpush.xpose.msra.mxu0 %v2912
    %2995 = vmatpush.xpose.msra.mxu0 %v2909
    %2996 = vmatpush.xpose.msra.mxu0 %v2906
    %2997 = vmatpush.xpose.msra.mxu0 %v2903
    %2998 = vmatpush.xpose.msra.mxu0 %v2900
    %2999 = vmatpush.xpose.msra.mxu0 %v2897
    %3000 = vmatpush.xpose.msra.mxu0 %v2894
    %3001 = vmatpush.xpose.msra.mxu0 %v2891
    %3002 = vmatmul.f32.gmra.mxu0 %v568
    %v3003 = vpop.f32.mrf.mxu0
    %v3004 = vadd.f32 %v549, %v3003
    %3005 = vmatmul.f32.gmra.mxu0 %v571
    %v3006 = vpop.f32.mrf.mxu0
    %v3007 = vadd.f32 %v554, %v3006
    %3008 = vmatmul.f32.gmra.mxu0 %v574
    %v3009 = vpop.f32.mrf.mxu0
    %v3010 = vadd.f32 %v559, %v3009
    %3011 = vmatmul.f32.gmra.mxu0 %v577
    %v3012 = vpop.f32.mrf.mxu0
    %v3013 = vadd.f32 %v564, %v3012
    %3014 = vdwg.mxu0
    %3015 = vmatpush.xpose.msra.mxu0 %v2984
    %3016 = vmatpush.xpose.msra.mxu0 %v2981
    %3017 = vmatpush.xpose.msra.mxu0 %v2978
    %3018 = vmatpush.xpose.msra.mxu0 %v2975
    %3019 = vmatpush.xpose.msra.mxu0 %v2972
    %3020 = vmatpush.xpose.msra.mxu0 %v2969
    %3021 = vmatpush.xpose.msra.mxu0 %v2966
    %3022 = vmatpush.xpose.msra.mxu0 %v2963
    %3023 = vmatpush.xpose.msra.mxu0 %v2960
    %3024 = vmatpush.xpose.msra.mxu0 %v2957
    %3025 = vmatpush.xpose.msra.mxu0 %v2954
    %3026 = vmatpush.xpose.msra.mxu0 %v2951
    %3027 = vmatpush.xpose.msra.mxu0 %v2948
    %3028 = vmatpush.xpose.msra.mxu0 %v2945
    %3029 = vmatpush.xpose.msra.mxu0 %v2942
    %3030 = vmatpush.xpose.msra.mxu0 %v2939
    %3031 = vmatmul.f32.gmra.mxu0 %v568
    %v3032 = vpop.f32.mrf.mxu0
    %v3033 = vadd.f32 %v549, %v3032
    %3034 = vmatmul.f32.gmra.mxu0 %v571
    %v3035 = vpop.f32.mrf.mxu0
    %v3036 = vadd.f32 %v554, %v3035
    %3037 = vmatmul.f32.gmra.mxu0 %v574
    %v3038 = vpop.f32.mrf.mxu0
    %v3039 = vadd.f32 %v559, %v3038
    %3040 = vmatmul.f32.gmra.mxu0 %v577
    %v3041 = vpop.f32.mrf.mxu0
    %v3042 = vadd.f32 %v564, %v3041
    %3043 = vdwg.mxu0
    %v3044 = vtanh.pop %v3004
    %v3045 = vtanh.pop %v3033
    %v3046 = vtanh.pop %v3007
    %v3047 = vtanh.pop %v3036
    %v3048 = vtanh.pop %v3010
    %v3049 = vtanh.pop %v3039
    %v3050 = vtanh.pop %v3013
    %v3051 = vtanh.pop %v3042
    %3052 = vmatpush.msra.mxu0 0.0
    %3053 = vmatpush.msra.mxu0 0.0
    %3054 = vmatpush.msra.mxu0 0.0
    %3055 = vmatpush.msra.mxu0 0.0
    %3056 = vmatpush.msra.mxu0 0.0
    %3057 = vmatpush.msra.mxu0 0.0
    %3058 = vmatpush.msra.mxu0 0.0
    %3059 = vmatpush.msra.mxu0 0.0
    %3060 = vmatpush.msra.mxu0 0.0
    %3061 = vmatpush.msra.mxu0 0.0
    %3062 = vmatpush.msra.mxu0 0.0
    %3063 = vmatpush.msra.mxu0 0.0
    %3064 = vmatpush.msra.mxu0 %v3050
    %3065 = vmatpush.msra.mxu0 %v3048
    %3066 = vmatpush.msra.mxu0 %v3046
    %3067 = vmatpush.msra.mxu0 %v3044
    %3068 = vmatmul.f32.gmra.mxu0 %v758
    %v3069 = vpop.f32.mrf.mxu0
    %v3070 = vadd.f32 %v743, %v3069
    %3071 = vmatmul.f32.gmra.mxu0 %v761
    %v3072 = vpop.f32.mrf.mxu0
    %v3073 = vadd.f32 %v747, %v3072
    %3074 = vmatmul.f32.gmra.mxu0 %v764
    %v3075 = vpop.f32.mrf.mxu0
    %v3076 = vadd.f32 %v751, %v3075
    %3077 = vmatmul.f32.gmra.mxu0 %v767
    %v3078 = vpop.f32.mrf.mxu0
    %v3079 = vadd.f32 %v755, %v3078
    %3080 = vdwg.mxu0
    %3081 = vmatpush.msra.mxu0 0.0
    %3082 = vmatpush.msra.mxu0 0.0
    %3083 = vmatpush.msra.mxu0 0.0
    %3084 = vmatpush.msra.mxu0 0.0
    %3085 = vmatpush.msra.mxu0 0.0
    %3086 = vmatpush.msra.mxu0 0.0
    %3087 = vmatpush.msra.mxu0 0.0
    %3088 = vmatpush.msra.mxu0 0.0
    %3089 = vmatpush.msra.mxu0 0.0
    %3090 = vmatpush.msra.mxu0 0.0
    %3091 = vmatpush.msra.mxu0 0.0
    %3092 = vmatpush.msra.mxu0 0.0
    %3093 = vmatpush.msra.mxu0 %v3051
    %3094 = vmatpush.msra.mxu0 %v3049
    %3095 = vmatpush.msra.mxu0 %v3047
    %3096 = vmatpush.msra.mxu0 %v3045
    %3097 = vmatmul.f32.gmra.mxu0 %v758
    %v3098 = vpop.f32.mrf.mxu0
    %v3099 = vadd.f32 %v743, %v3098
    %3100 = vmatmul.f32.gmra.mxu0 %v761
    %v3101 = vpop.f32.mrf.mxu0
    %v3102 = vadd.f32 %v747, %v3101
    %3103 = vmatmul.f32.gmra.mxu0 %v764
    %v3104 = vpop.f32.mrf.mxu0
    %v3105 = vadd.f32 %v751, %v3104
    %3106 = vmatmul.f32.gmra.mxu0 %v767
    %v3107 = vpop.f32.mrf.mxu0
    %v3108 = vadd.f32 %v755, %v3107
    %3109 = vdwg.mxu0
    %v3110 = vtanh.pop %v3070
    %v3111 = vtanh.pop %v3099
    %v3112 = vtanh.pop %v3073
    %v3113 = vtanh.pop %v3102
    %v3114 = vtanh.pop %v3076
    %v3115 = vtanh.pop %v3105
    %v3116 = vtanh.pop %v3079
    %v3117 = vtanh.pop %v3108
    %3118 = vmatpush.msra.mxu0 0.0
    %3119 = vmatpush.msra.mxu0 0.0
    %3120 = vmatpush.msra.mxu0 0.0
    %3121 = vmatpush.msra.mxu0 0.0
    %3122 = vmatpush.msra.mxu0 0.0
    %3123 = vmatpush.msra.mxu0 0.0
    %3124 = vmatpush.msra.mxu0 0.0
    %3125 = vmatpush.msra.mxu0 0.0
    %3126 = vmatpush.msra.mxu0 0.0
    %3127 = vmatpush.msra.mxu0 0.0
    %3128 = vmatpush.msra.mxu0 0.0
    %3129 = vmatpush.msra.mxu0 0.0
    %3130 = vmatpush.msra.mxu0 %v3116
    %3131 = vmatpush.msra.mxu0 %v3114
    %3132 = vmatpush.msra.mxu0 %v3112
    %3133 = vmatpush.msra.mxu0 %v3110
    %3134 = vmatmul.f32.gmra.mxu0 %v841
    %v3135 = vpop.f32.mrf.mxu0
    %v3136 = vadd.f32 %v837, %v3135
    %3137 = vdwg.mxu0
    %3138 = vmatpush.msra.mxu0 0.0
    %3139 = vmatpush.msra.mxu0 0.0
    %3140 = vmatpush.msra.mxu0 0.0
    %3141 = vmatpush.msra.mxu0 0.0
    %3142 = vmatpush.msra.mxu0 0.0
    %3143 = vmatpush.msra.mxu0 0.0
    %3144 = vmatpush.msra.mxu0 0.0
    %3145 = vmatpush.msra.mxu0 0.0
    %3146 = vmatpush.msra.mxu0 0.0
    %3147 = vmatpush.msra.mxu0 0.0
    %3148 = vmatpush.msra.mxu0 0.0
    %3149 = vmatpush.msra.mxu0 0.0
    %3150 = vmatpush.msra.mxu0 %v3117
    %3151 = vmatpush.msra.mxu0 %v3115
    %3152 = vmatpush.msra.mxu0 %v3113
    %3153 = vmatpush.msra.mxu0 %v3111
    %3154 = vmatmul.f32.gmra.mxu0 %v841
    %v3155 = vpop.f32.mrf.mxu0
    %v3156 = vadd.f32 %v837, %v3155
    %3157 = vdwg.mxu0
    %v3160 = vrot.slane %v3156, 7
    %v3161 = vsel %vm886, %v3136, %v3160
    %s3163 = scalar_lea.vmem [#allocation2], 6
    %3164 = vst.msk [vmem:[%s3163] sm:$0x3] %vm892, %v3161
    // Predicated region
    $region22: #{mad_pinn_forward.1} parent=1 // pred_check
      _
    $region23: #{mad_pinn_forward.1} parent=1 // pred_check_branch
      %3166 = sbr.rel (0) target = $region25
    $region24: #{mad_pinn_forward.1} parent=1 // pred_region
      %3168 = vsyncadd [#allocation3], 0
      %s3169 = sshll.u32 [#allocation2], 4
      %s3170 = int_to_ptr.vmem [resolvable:$true] %s3169
      %s3171 = sshll.u32 %s5, 4
      %s3172 = int_to_ptr.hbm [resolvable:$true] %s3171
      %3177 = dma.vmem_to_hbm [thread:$0]  %s3170, 128, %s3172, [#allocation3], 32, 32, 2
    $region25: #{mad_pinn_forward.1} parent=1 // pred_fallthru
      _
    // Predicated region
    $region26: #{mad_pinn_forward.1} parent=1 // pred_check
      _
    $region27: #{mad_pinn_forward.1} parent=1 // pred_check_branch
      %3179 = sbr.rel (0) target = $region29
    $region28: #{mad_pinn_forward.1} parent=1 // pred_region
      %3181 = dma.done [#allocation3], 128
    $region29: #{mad_pinn_forward.1} parent=1 // pred_fallthru
      _
    %3182 = vsyncpa [#allocation3], 1

</llo_original>
